<compile_context>
chip_gen: v6e
topology: v6e:2x2x1
jax: 0.10.0
libtpu: 0.0.40
codegen_flags: <defaults>
</compile_context>

<pallas_src>
import functools

import jax
import jax.numpy as jnp
from jax import lax
from jax.experimental import pallas as pl
from jax.experimental.pallas import tpu as pltpu


# ---------------------------------------------------------------------------
# Interpolation matrices (weight-only, built once in the wrapper).
# ---------------------------------------------------------------------------
def _bilinear_matrix(n_in, n_out):
    # Separable weights of nn.Upsample(mode='bilinear', align_corners=True).
    if n_in == 1:
        return jnp.ones((n_out, 1), jnp.float32)
    pos = jnp.arange(n_out, dtype=jnp.float32) * (n_in - 1) / (n_out - 1)
    lo = jnp.clip(jnp.floor(pos).astype(jnp.int32), 0, n_in - 1)
    hi = jnp.minimum(lo + 1, n_in - 1)
    frac = pos - lo.astype(jnp.float32)
    m = jnp.zeros((n_out, n_in), jnp.float32)
    m = m.at[jnp.arange(n_out), lo].add(1.0 - frac)
    m = m.at[jnp.arange(n_out), hi].add(frac)
    return m


def _nearest_matrix(n_in, n_out):
    # One-hot selection matrix of F.interpolate(mode='nearest').
    idx = jnp.floor(jnp.arange(n_out, dtype=jnp.float32) * (n_in / n_out))
    idx = jnp.clip(idx.astype(jnp.int32), 0, n_in - 1)
    return (jnp.arange(n_in)[None, :] == idx[:, None]).astype(jnp.float32)


def _nearest_resize_nchw(x, oh, ow):
    B, C, H, W = x.shape
    hi = jnp.floor(jnp.arange(oh) * (H / oh)).astype(jnp.int32)
    wi = jnp.floor(jnp.arange(ow) * (W / ow)).astype(jnp.int32)
    return x[:, :, hi, :][:, :, :, wi]


def _pick_row_tile(OH, OW, Cout, budget_bytes=8 * 1024 * 1024):
    """Largest row tile (divisor of OH, multiple of 8) whose double-buffered
    output block stays well under the VMEM budget (re-derived for v7x's 64 MiB)."""
    cands = [t for t in range(8, OH + 1, 8) if OH % t == 0]
    if not cands:
        return OH
    per_row_bytes = OW * Cout * 4  # f32 output row in the lane-dense wide layout
    fitting = [t for t in cands if 2 * t * per_row_bytes <= budget_bytes]
    return max(fitting) if fitting else min(cands)


# ---------------------------------------------------------------------------
# Fused kernel: upsample + conv3x3 + BN1 + ReLU + conv1x1 + BN2 (+ skip) + ReLU
# ---------------------------------------------------------------------------
def _make_fused_kernel(residual, cd):
    def _core(x_ref, l_refs, g_refs, b1_ref, w2_ref, b2_ref, o_ref, res_refs):
        mm = lambda a, b: jnp.dot(a, b, preferred_element_type=jnp.float32)
        x2d = x_ref[0]                                   # (H, W*Cin), matmul dtype
        # bilinear upsample + 3x3 conv (+ BN1 scale), fully folded into matmuls.
        c1 = None
        for l_ref, g_ref in zip(l_refs, g_refs):
            a = mm(x2d, g_ref[...]).astype(cd)           # (H, OW*D)
            part = mm(l_ref[...], a)                     # (T, OW*D), f32
            c1 = part if c1 is None else c1 + part
        h = jnp.maximum(c1 + b1_ref[...], 0.0)           # BN1 bias + ReLU
        # 1x1 conv + BN2 (block-diagonal weight keeps the lane-dense layout).
        y = mm(h.astype(cd), w2_ref[...]) + b2_ref[...]  # (T, OW*Cout)
        if res_refs is not None:
            skip_ref, rh_ref, gu_ref, bu_ref = res_refs
            au = mm(skip_ref[0], gu_ref[...]).astype(cd) # (Hs, OW*Cout)
            y = y + mm(rh_ref[...], au) + bu_ref[...]
        o_ref[0] = jnp.maximum(y, 0.0)

    if residual:
        def kernel(x_ref, skip_ref, l0, l1, l2, rh, g0, g1, g2,
                   b1, w2blk, b2, gu, bu, o_ref):
            _core(x_ref, (l0, l1, l2), (g0, g1, g2), b1, w2blk, b2, o_ref,
                  (skip_ref, rh, gu, bu))
    else:
        def kernel(x_ref, l0, l1, l2, g0, g1, g2, b1, w2blk, b2, o_ref):
            _core(x_ref, (l0, l1, l2), (g0, g1, g2), b1, w2blk, b2, o_ref, None)
    return kernel


# ---------------------------------------------------------------------------
# Forward wrapper: weight folding (once-per-model math) + one pallas_call.
# ---------------------------------------------------------------------------
def decoder_block_forward(x, skip, params, residual=True, eps=1e-5,
                          row_tile=None, matmul_dtype=jnp.bfloat16):
    hp = lax.Precision.HIGHEST
    B, Cin, H, W = x.shape
    OH, OW = 2 * H, 2 * W
    Cout, D = params['w2'].shape[0], params['w2'].shape[1]

    # --- fold eval-mode BatchNorm into weights (scales) and biases.
    s1 = params['gamma1'] / jnp.sqrt(params['var1'] + eps)            # (D,)
    b1f = params['beta1'] - params['mean1'] * s1                      # (D,)
    s2 = params['gamma2'] / jnp.sqrt(params['var2'] + eps)            # (Cout,)
    b2f = params['beta2'] - params['mean2'] * s2                      # (Cout,)
    w1s = params['w1'] * s1[:, None, None, None]                      # (D, Cin, 3, 3)
    w2s = params['w2'][:, :, 0, 0].T * s2[None, :]                    # (D, Cout)

    # --- fold bilinear interp + conv taps into weight-only matrices.
    Lh = _bilinear_matrix(H, OH)                                      # (OH, H)
    Lw = _bilinear_matrix(W, OW)                                      # (OW, W)
    Lhp = jnp.pad(Lh, ((1, 1), (0, 0)))                               # (OH+2, H)  (conv pad=1)
    Lwp = jnp.pad(Lw, ((1, 1), (0, 0)))                               # (OW+2, W)
    L_ky = [Lhp[ky:ky + OH, :] for ky in range(3)]                    # 3 x (OH, H)
    Lwp_sh = jnp.stack([Lwp[kx:kx + OW, :] for kx in range(3)], 0)    # (3, OW, W)
    G_ky = []
    for ky in range(3):
        t = jnp.einsum('xow,dcx->wcod', Lwp_sh, w1s[:, :, ky, :], precision=hp)
        G_ky.append(t.reshape(W * Cin, OW * D))                       # (W*Cin, OW*D)

    w2_blk = jnp.kron(jnp.eye(OW, dtype=jnp.float32), w2s)            # (OW*D, OW*Cout)
    b1w = jnp.tile(b1f, OW).reshape(1, OW * D)
    b2w = jnp.tile(b2f, OW).reshape(1, OW * Cout)

    # --- activations in channel-flattened, lane-dense layout (small-input glue only).
    x2d = jnp.transpose(x, (0, 2, 3, 1)).reshape(B, H, W * Cin)

    if residual:
        Cs = params['wu'].shape[1]
        Hs, Ws = skip.shape[2], skip.shape[3]
        Rh = _nearest_matrix(Hs, OH)                                  # (OH, Hs)
        Rw = _nearest_matrix(Ws, OW)                                  # (OW, Ws)
        wum = params['wu'][:, :, 0, 0].T                              # (Cs, Cout)
        Gu = jnp.einsum('ow,sc->wsoc', Rw, wum, precision=hp)
        Gu = Gu.reshape(Ws * Cs, OW * Cout)                           # (Ws*Cs, OW*Cout)
        buw = jnp.tile(params['bu'], OW).reshape(1, OW * Cout)
        skip2d = jnp.transpose(skip, (0, 2, 3, 1)).reshape(B, Hs, Ws * Cs)

    # --- bf16 operands in HBM (f32 accumulation inside the kernel).
    cd = matmul_dtype
    x2d = x2d.astype(cd)
    L_ky = [l.astype(cd) for l in L_ky]
    G_ky = [g.astype(cd) for g in G_ky]
    w2_blk = w2_blk.astype(cd)
    if residual:
        skip2d = skip2d.astype(cd)
        Rh = Rh.astype(cd)
        Gu = Gu.astype(cd)

    # --- row tiling (bounds VMEM / accumulator size; gives pipeline+megacore depth).
    T = _pick_row_tile(OH, OW, Cout) if row_tile is None else row_tile
    if OH % T != 0 or (T != OH and T % 8 != 0):
        T = OH
    n_tiles = OH // T

    bmap = lambda b, t: (b, 0, 0)      # per-batch block (re-used across row tiles)
    tmap = lambda b, t: (t, 0)         # per-row-tile block
    cmap = lambda b, t: (0, 0)         # resident weights / biases

    args, specs = [], []

    def add(a, spec):
        args.append(a)
        specs.append(spec)

    add(x2d, pl.BlockSpec((1, H, W * Cin), bmap))
    if residual:
        add(skip2d, pl.BlockSpec((1, Hs, Ws * Cs), bmap))
    for l in L_ky:
        add(l, pl.BlockSpec((T, H), tmap))
    if residual:
        add(Rh, pl.BlockSpec((T, Hs), tmap))
    for g in G_ky:
        add(g, pl.BlockSpec((W * Cin, OW * D), cmap))
    add(b1w, pl.BlockSpec((1, OW * D), cmap))
    add(w2_blk, pl.BlockSpec((OW * D, OW * Cout), cmap))
    add(b2w, pl.BlockSpec((1, OW * Cout), cmap))
    if residual:
        add(Gu, pl.BlockSpec((Ws * Cs, OW * Cout), cmap))
        add(buw, pl.BlockSpec((1, OW * Cout), cmap))

    out_wide = pl.pallas_call(
        _make_fused_kernel(residual, cd),
        out_shape=jax.ShapeDtypeStruct((B, OH, OW * Cout), jnp.float32),
        grid=(B, n_tiles),
        in_specs=specs,
        out_specs=pl.BlockSpec((1, T, OW * Cout), lambda b, t: (b, t, 0)),
        compiler_params=pltpu.CompilerParams(
            dimension_semantics=("parallel", "parallel"),
            vmem_limit_bytes=32 * 1024 * 1024),
    )(*args)

    # final API-layout glue (NCHW) on the output only.
    return out_wide.reshape(B, OH, OW, Cout).transpose(0, 3, 1, 2)


# ---------------------------------------------------------------------------
# Parameter init (matches the PyTorch module's shapes; BN in eval mode).
# ---------------------------------------------------------------------------
def init_decoder_block_params(key, in_channels, out_channels, skip_dim, residual, factor):
    dim = out_channels // factor
    ks = jax.random.split(key, 8)

    def conv_w(k, shape):
        fan_in = shape[1] * shape[2] * shape[3]
        bound = 1.0 / jnp.sqrt(fan_in)
        return jax.random.uniform(k, shape, jnp.float32, -bound, bound)

    p = dict(
        w1=conv_w(ks[0], (dim, in_channels, 3, 3)),
        gamma1=jax.random.uniform(ks[1], (dim,), jnp.float32, 0.5, 1.5),
        beta1=jax.random.uniform(ks[2], (dim,), jnp.float32, -0.5, 0.5),
        w2=conv_w(ks[3], (out_channels, dim, 1, 1)),
        gamma2=jax.random.uniform(ks[4], (out_channels,), jnp.float32, 0.5, 1.5),
        beta2=jax.random.uniform(ks[5], (out_channels,), jnp.float32, -0.5, 0.5),
        mean1=jnp.zeros((dim,), jnp.float32),
        var1=jnp.ones((dim,), jnp.float32),
        mean2=jnp.zeros((out_channels,), jnp.float32),
        var2=jnp.ones((out_channels,), jnp.float32),
    )
    if residual:
        p['wu'] = conv_w(ks[6], (out_channels, skip_dim, 1, 1))
        bound = 1.0 / jnp.sqrt(skip_dim)
        p['bu'] = jax.random.uniform(ks[7], (out_channels,), jnp.float32, -bound, bound)
    return p


# ---------------------------------------------------------------------------
# Pure-JAX f32 reference (HIGHEST precision) for validation.
# ---------------------------------------------------------------------------
def decoder_block_reference(x, skip, params, residual=True, eps=1e-5):
    hp = lax.Precision.HIGHEST
    B, Cin, H, W = x.shape
    OH, OW = 2 * H, 2 * W
    lh = _bilinear_matrix(H, OH)
    lw = _bilinear_matrix(W, OW)
    up = jnp.einsum('oh,bchw->bcow', lh, x, precision=hp)
    up = jnp.einsum('pw,bcow->bcop', lw, up, precision=hp)
    dn = ('NCHW', 'OIHW', 'NCHW')
    h = lax.conv_general_dilated(up, params['w1'], (1, 1), ((1, 1), (1, 1)),
                                 dimension_numbers=dn, precision=hp)
    s1 = params['gamma1'] / jnp.sqrt(params['var1'] + eps)
    h = h * s1[None, :, None, None] \
        + (params['beta1'] - params['mean1'] * s1)[None, :, None, None]
    h = jnp.maximum(h, 0.0)
    y = lax.conv_general_dilated(h, params['w2'], (1, 1), 'VALID',
                                 dimension_numbers=dn, precision=hp)
    s2 = params['gamma2'] / jnp.sqrt(params['var2'] + eps)
    y = y * s2[None, :, None, None] \
        + (params['beta2'] - params['mean2'] * s2)[None, :, None, None]
    if residual:
        u = lax.conv_general_dilated(skip, params['wu'], (1, 1), 'VALID',
                                     dimension_numbers=dn, precision=hp)
        u = u + params['bu'][None, :, None, None]
        u = _nearest_resize_nchw(u, OH, OW)
        y = y + u
    return jnp.maximum(y, 0.0)


if __name__ == "__main__":
    in_channels, out_channels, skip_dim, factor = 8, 16, 6, 2
    B, H, W = 2, 16, 16

    key = jax.random.PRNGKey(0)
    kx, ks, kp = jax.random.split(key, 3)
    x = jax.random.normal(kx, (B, in_channels, H, W), jnp.float32)
    skip = jax.random.normal(ks, (B, skip_dim, H, W), jnp.float32)
    params = init_decoder_block_params(kp, in_channels, out_channels, skip_dim,
                                       True, factor)

    # row_tile=16 -> grid (B, OH//16) = (2, 2): 4 parallel steps (pipelining +
    # megacore sharding even at this small demo size).
    fwd = jax.jit(functools.partial(decoder_block_forward, residual=True,
                                    row_tile=16, matmul_dtype=jnp.bfloat16))
    out = jax.block_until_ready(fwd(x, skip, params))
    assert out.shape == (B, out_channels, 2 * H, 2 * W), out.shape

    ref = decoder_block_reference(x, skip, params, residual=True)
    err = float(jnp.max(jnp.abs(out - ref)))
    scale = float(jnp.max(jnp.abs(ref)))
    # Precision-aware bound: bf16 matmul operands with f32 accumulation.
    assert err <= 2e-2 * max(1.0, scale), f"max abs error {err} (ref max {scale})"

    # residual=False path uses the smaller kernel signature (no dummy skip DMAs).
    fwd_nr = jax.jit(functools.partial(decoder_block_forward, residual=False,
                                       row_tile=16, matmul_dtype=jnp.bfloat16))
    out_nr = jax.block_until_ready(fwd_nr(x, skip, params))
    ref_nr = decoder_block_reference(x, skip, params, residual=False)
    err_nr = float(jnp.max(jnp.abs(out_nr - ref_nr)))
    scale_nr = float(jnp.max(jnp.abs(ref_nr)))
    assert err_nr <= 2e-2 * max(1.0, scale_nr), f"residual=False error {err_nr}"

    print("KERNEL_OK")
</pallas_src>

<mosaic_0001>
module attributes {stable_mosaic.version = 11 : i64} {
  func.func private @main(%arg0: i32) attributes {dimension_semantics = [#tpu.dimension_semantics<core_parallel>], iteration_bounds = array<i64: 2>, tpu.core_type = #tpu.core_type<sc_scalar_subcore>, window_params = []} {
    return
  }
}

module attributes {stable_mosaic.version = 11 : i64} {
  func.func private @main(%arg0: i32) attributes {dimension_semantics = [#tpu.dimension_semantics<core_parallel>], iteration_bounds = array<i64: 2>, tpu.core_type = #tpu.core_type<sc_scalar_subcore>, window_params = []} {
    return
  }
}

module attributes {stable_mosaic.version = 11 : i64} {
  func.func @kernel(%arg0: i32, %arg1: i32, %arg2: memref<1x16x128xbf16, #tpu.memory_space<vmem>>, %arg3: memref<1x16x96xbf16, #tpu.memory_space<vmem>>, %arg4: memref<16x16xbf16, #tpu.memory_space<vmem>>, %arg5: memref<16x16xbf16, #tpu.memory_space<vmem>>, %arg6: memref<16x16xbf16, #tpu.memory_space<vmem>>, %arg7: memref<16x16xbf16, #tpu.memory_space<vmem>>, %arg8: memref<128x256xbf16, #tpu.memory_space<vmem>>, %arg9: memref<128x256xbf16, #tpu.memory_space<vmem>>, %arg10: memref<128x256xbf16, #tpu.memory_space<vmem>>, %arg11: memref<1x256xf32, #tpu.memory_space<vmem>>, %arg12: memref<256x512xbf16, #tpu.memory_space<vmem>>, %arg13: memref<1x512xf32, #tpu.memory_space<vmem>>, %arg14: memref<96x512xbf16, #tpu.memory_space<vmem>>, %arg15: memref<1x512xf32, #tpu.memory_space<vmem>>, %arg16: memref<1x16x512xf32, #tpu.memory_space<vmem>>) attributes {dimension_semantics = [#tpu.dimension_semantics<parallel>, #tpu.dimension_semantics<parallel>], iteration_bounds = array<i64: 2, 2>, scalar_prefetch = 0 : i64, scratch_operands = 0 : i64, tpu.core_type = #tpu.core_type<tc>, window_params = [{transform_indices = @transform_0, window_bounds = array<i64: 1, 16, 128>}, {transform_indices = @transform_1, window_bounds = array<i64: 1, 16, 96>}, {transform_indices = @transform_2, window_bounds = array<i64: 16, 16>}, {transform_indices = @transform_3, window_bounds = array<i64: 16, 16>}, {transform_indices = @transform_4, window_bounds = array<i64: 16, 16>}, {transform_indices = @transform_5, window_bounds = array<i64: 16, 16>}, {pipeline_mode = #tpu.pipeline_mode<synchronous>, transform_indices = @transform_6, window_bounds = array<i64: 128, 256>}, {pipeline_mode = #tpu.pipeline_mode<synchronous>, transform_indices = @transform_7, window_bounds = array<i64: 128, 256>}, {pipeline_mode = #tpu.pipeline_mode<synchronous>, transform_indices = @transform_8, window_bounds = array<i64: 128, 256>}, {pipeline_mode = #tpu.pipeline_mode<synchronous>, transform_indices = @transform_9, window_bounds = array<i64: 1, 256>}, {pipeline_mode = #tpu.pipeline_mode<synchronous>, transform_indices = @transform_10, window_bounds = array<i64: 256, 512>}, {pipeline_mode = #tpu.pipeline_mode<synchronous>, transform_indices = @transform_11, window_bounds = array<i64: 1, 512>}, {pipeline_mode = #tpu.pipeline_mode<synchronous>, transform_indices = @transform_12, window_bounds = array<i64: 96, 512>}, {pipeline_mode = #tpu.pipeline_mode<synchronous>, transform_indices = @transform_13, window_bounds = array<i64: 1, 512>}, {transform_indices = @transform_14, window_bounds = array<i64: 1, 16, 512>}]} {
    %c0 = arith.constant 0 : index
    %c0_0 = arith.constant 0 : index
    %c0_1 = arith.constant 0 : index
    %0 = vector.load %arg2[%c0, %c0_0, %c0_1] : memref<1x16x128xbf16, #tpu.memory_space<vmem>>, vector<1x16x128xbf16>
    %1 = vector.shape_cast %0 : vector<1x16x128xbf16> to vector<16x128xbf16>
    %c0_2 = arith.constant 0 : index
    %c0_3 = arith.constant 0 : index
    %2 = vector.load %arg8[%c0_2, %c0_3] : memref<128x256xbf16, #tpu.memory_space<vmem>>, vector<128x256xbf16>
    %cst = arith.constant dense<0.000000e+00> : vector<16x256xf32>
    %3 = tpu.matmul %1, %2, %cst {dimension_numbers = #tpu.dot_dimension_numbers<[1], [0], [0], [1], [0, 0, 1, 1], [], []>} : vector<16x128xbf16>, vector<128x256xbf16>, vector<16x256xf32> -> vector<16x256xf32>
    %4 = arith.truncf %3 : vector<16x256xf32> to vector<16x256xbf16>
    %c0_4 = arith.constant 0 : index
    %c0_5 = arith.constant 0 : index
    %5 = vector.load %arg4[%c0_4, %c0_5] : memref<16x16xbf16, #tpu.memory_space<vmem>>, vector<16x16xbf16>
    %cst_6 = arith.constant dense<0.000000e+00> : vector<16x256xf32>
    %6 = tpu.matmul %5, %4, %cst_6 {dimension_numbers = #tpu.dot_dimension_numbers<[1], [0], [0], [1], [0, 0, 1, 1], [], []>} : vector<16x16xbf16>, vector<16x256xbf16>, vector<16x256xf32> -> vector<16x256xf32>
    %c0_7 = arith.constant 0 : index
    %c0_8 = arith.constant 0 : index
    %7 = vector.load %arg9[%c0_7, %c0_8] : memref<128x256xbf16, #tpu.memory_space<vmem>>, vector<128x256xbf16>
    %cst_9 = arith.constant dense<0.000000e+00> : vector<16x256xf32>
    %8 = tpu.matmul %1, %7, %cst_9 {dimension_numbers = #tpu.dot_dimension_numbers<[1], [0], [0], [1], [0, 0, 1, 1], [], []>} : vector<16x128xbf16>, vector<128x256xbf16>, vector<16x256xf32> -> vector<16x256xf32>
    %9 = arith.truncf %8 : vector<16x256xf32> to vector<16x256xbf16>
    %c0_10 = arith.constant 0 : index
    %c0_11 = arith.constant 0 : index
    %10 = vector.load %arg5[%c0_10, %c0_11] : memref<16x16xbf16, #tpu.memory_space<vmem>>, vector<16x16xbf16>
    %cst_12 = arith.constant dense<0.000000e+00> : vector<16x256xf32>
    %11 = tpu.matmul %10, %9, %cst_12 {dimension_numbers = #tpu.dot_dimension_numbers<[1], [0], [0], [1], [0, 0, 1, 1], [], []>} : vector<16x16xbf16>, vector<16x256xbf16>, vector<16x256xf32> -> vector<16x256xf32>
    %12 = arith.addf %6, %11 : vector<16x256xf32>
    %c0_13 = arith.constant 0 : index
    %c0_14 = arith.constant 0 : index
    %13 = vector.load %arg10[%c0_13, %c0_14] : memref<128x256xbf16, #tpu.memory_space<vmem>>, vector<128x256xbf16>
    %cst_15 = arith.constant dense<0.000000e+00> : vector<16x256xf32>
    %14 = tpu.matmul %1, %13, %cst_15 {dimension_numbers = #tpu.dot_dimension_numbers<[1], [0], [0], [1], [0, 0, 1, 1], [], []>} : vector<16x128xbf16>, vector<128x256xbf16>, vector<16x256xf32> -> vector<16x256xf32>
    %15 = arith.truncf %14 : vector<16x256xf32> to vector<16x256xbf16>
    %c0_16 = arith.constant 0 : index
    %c0_17 = arith.constant 0 : index
    %16 = vector.load %arg6[%c0_16, %c0_17] : memref<16x16xbf16, #tpu.memory_space<vmem>>, vector<16x16xbf16>
    %cst_18 = arith.constant dense<0.000000e+00> : vector<16x256xf32>
    %17 = tpu.matmul %16, %15, %cst_18 {dimension_numbers = #tpu.dot_dimension_numbers<[1], [0], [0], [1], [0, 0, 1, 1], [], []>} : vector<16x16xbf16>, vector<16x256xbf16>, vector<16x256xf32> -> vector<16x256xf32>
    %18 = arith.addf %12, %17 : vector<16x256xf32>
    %c0_19 = arith.constant 0 : index
    %c0_20 = arith.constant 0 : index
    %19 = vector.load %arg11[%c0_19, %c0_20] : memref<1x256xf32, #tpu.memory_space<vmem>>, vector<1x256xf32>
    %20 = vector.broadcast %19 : vector<1x256xf32> to vector<16x256xf32>
    %21 = arith.addf %18, %20 : vector<16x256xf32>
    %cst_21 = arith.constant 0.000000e+00 : f32
    %22 = vector.broadcast %cst_21 : f32 to vector<16x256xf32>
    %23 = arith.maximumf %21, %22 : vector<16x256xf32>
    %24 = arith.truncf %23 : vector<16x256xf32> to vector<16x256xbf16>
    %c0_22 = arith.constant 0 : index
    %c0_23 = arith.constant 0 : index
    %25 = vector.load %arg12[%c0_22, %c0_23] : memref<256x512xbf16, #tpu.memory_space<vmem>>, vector<256x512xbf16>
    %cst_24 = arith.constant dense<0.000000e+00> : vector<16x512xf32>
    %26 = tpu.matmul %24, %25, %cst_24 {dimension_numbers = #tpu.dot_dimension_numbers<[1], [0], [0], [1], [0, 0, 1, 1], [], []>} : vector<16x256xbf16>, vector<256x512xbf16>, vector<16x512xf32> -> vector<16x512xf32>
    %c0_25 = arith.constant 0 : index
    %c0_26 = arith.constant 0 : index
    %27 = vector.load %arg13[%c0_25, %c0_26] : memref<1x512xf32, #tpu.memory_space<vmem>>, vector<1x512xf32>
    %28 = vector.broadcast %27 : vector<1x512xf32> to vector<16x512xf32>
    %29 = arith.addf %26, %28 : vector<16x512xf32>
    %c0_27 = arith.constant 0 : index
    %c0_28 = arith.constant 0 : index
    %c0_29 = arith.constant 0 : index
    %30 = vector.load %arg3[%c0_27, %c0_28, %c0_29] : memref<1x16x96xbf16, #tpu.memory_space<vmem>>, vector<1x16x96xbf16>
    %31 = vector.shape_cast %30 : vector<1x16x96xbf16> to vector<16x96xbf16>
    %c0_30 = arith.constant 0 : index
    %c0_31 = arith.constant 0 : index
    %32 = vector.load %arg14[%c0_30, %c0_31] : memref<96x512xbf16, #tpu.memory_space<vmem>>, vector<96x512xbf16>
    %cst_32 = arith.constant dense<0.000000e+00> : vector<16x512xf32>
    %33 = tpu.matmul %31, %32, %cst_32 {dimension_numbers = #tpu.dot_dimension_numbers<[1], [0], [0], [1], [0, 0, 1, 1], [], []>} : vector<16x96xbf16>, vector<96x512xbf16>, vector<16x512xf32> -> vector<16x512xf32>
    %34 = arith.truncf %33 : vector<16x512xf32> to vector<16x512xbf16>
    %c0_33 = arith.constant 0 : index
    %c0_34 = arith.constant 0 : index
    %35 = vector.load %arg7[%c0_33, %c0_34] : memref<16x16xbf16, #tpu.memory_space<vmem>>, vector<16x16xbf16>
    %cst_35 = arith.constant dense<0.000000e+00> : vector<16x512xf32>
    %36 = tpu.matmul %35, %34, %cst_35 {dimension_numbers = #tpu.dot_dimension_numbers<[1], [0], [0], [1], [0, 0, 1, 1], [], []>} : vector<16x16xbf16>, vector<16x512xbf16>, vector<16x512xf32> -> vector<16x512xf32>
    %37 = arith.addf %29, %36 : vector<16x512xf32>
    %c0_36 = arith.constant 0 : index
    %c0_37 = arith.constant 0 : index
    %38 = vector.load %arg15[%c0_36, %c0_37] : memref<1x512xf32, #tpu.memory_space<vmem>>, vector<1x512xf32>
    %39 = vector.broadcast %38 : vector<1x512xf32> to vector<16x512xf32>
    %40 = arith.addf %37, %39 : vector<16x512xf32>
    %cst_38 = arith.constant 0.000000e+00 : f32
    %41 = vector.broadcast %cst_38 : f32 to vector<16x512xf32>
    %42 = arith.maximumf %40, %41 : vector<16x512xf32>
    %c0_39 = arith.constant 0 : index
    %c0_40 = arith.constant 0 : index
    %c0_41 = arith.constant 0 : index
    %43 = vector.load %arg16[%c0_39, %c0_40, %c0_41] : memref<1x16x512xf32, #tpu.memory_space<vmem>>, vector<1x16x512xf32>
    %44 = vector.shape_cast %43 : vector<1x16x512xf32> to vector<16x512xf32>
    %45 = vector.shape_cast %42 : vector<16x512xf32> to vector<1x16x512xf32>
    tpu.vector_store %arg16[%c0_39, %c0_40, %c0_41], %45 {strides = array<i32>} : memref<1x16x512xf32, #tpu.memory_space<vmem>>, vector<1x16x512xf32>,
    return
  }
  func.func @transform_0(%arg0: i32, %arg1: i32) -> (i32, i32, i32) {
    %c0_i32 = arith.constant 0 : i32
    %c0_i32_0 = arith.constant 0 : i32
    %c0_i32_1 = arith.constant 0 : i32
    return %arg0, %c0_i32, %c0_i32_0 : i32, i32, i32
  }
  func.func @transform_1(%arg0: i32, %arg1: i32) -> (i32, i32, i32) {
    %c0_i32 = arith.constant 0 : i32
    %c0_i32_0 = arith.constant 0 : i32
    %c0_i32_1 = arith.constant 0 : i32
    return %arg0, %c0_i32, %c0_i32_0 : i32, i32, i32
  }
  func.func @transform_2(%arg0: i32, %arg1: i32) -> (i32, i32) {
    %c0_i32 = arith.constant 0 : i32
    %c0_i32_0 = arith.constant 0 : i32
    return %arg1, %c0_i32 : i32, i32
  }
  func.func @transform_3(%arg0: i32, %arg1: i32) -> (i32, i32) {
    %c0_i32 = arith.constant 0 : i32
    %c0_i32_0 = arith.constant 0 : i32
    return %arg1, %c0_i32 : i32, i32
  }
  func.func @transform_4(%arg0: i32, %arg1: i32) -> (i32, i32) {
    %c0_i32 = arith.constant 0 : i32
    %c0_i32_0 = arith.constant 0 : i32
    return %arg1, %c0_i32 : i32, i32
  }
  func.func @transform_5(%arg0: i32, %arg1: i32) -> (i32, i32) {
    %c0_i32 = arith.constant 0 : i32
    %c0_i32_0 = arith.constant 0 : i32
    return %arg1, %c0_i32 : i32, i32
  }
  func.func @transform_6(%arg0: i32, %arg1: i32) -> (i32, i32) {
    %c0_i32 = arith.constant 0 : i32
    %c0_i32_0 = arith.constant 0 : i32
    %c0_i32_1 = arith.constant 0 : i32
    return %c0_i32, %c0_i32_0 : i32, i32
  }
  func.func @transform_7(%arg0: i32, %arg1: i32) -> (i32, i32) {
    %c0_i32 = arith.constant 0 : i32
    %c0_i32_0 = arith.constant 0 : i32
    %c0_i32_1 = arith.constant 0 : i32
    return %c0_i32, %c0_i32_0 : i32, i32
  }
  func.func @transform_8(%arg0: i32, %arg1: i32) -> (i32, i32) {
    %c0_i32 = arith.constant 0 : i32
    %c0_i32_0 = arith.constant 0 : i32
    %c0_i32_1 = arith.constant 0 : i32
    return %c0_i32, %c0_i32_0 : i32, i32
  }
  func.func @transform_9(%arg0: i32, %arg1: i32) -> (i32, i32) {
    %c0_i32 = arith.constant 0 : i32
    %c0_i32_0 = arith.constant 0 : i32
    %c0_i32_1 = arith.constant 0 : i32
    return %c0_i32, %c0_i32_0 : i32, i32
  }
  func.func @transform_10(%arg0: i32, %arg1: i32) -> (i32, i32) {
    %c0_i32 = arith.constant 0 : i32
    %c0_i32_0 = arith.constant 0 : i32
    %c0_i32_1 = arith.constant 0 : i32
    return %c0_i32, %c0_i32_0 : i32, i32
  }
  func.func @transform_11(%arg0: i32, %arg1: i32) -> (i32, i32) {
    %c0_i32 = arith.constant 0 : i32
    %c0_i32_0 = arith.constant 0 : i32
    %c0_i32_1 = arith.constant 0 : i32
    return %c0_i32, %c0_i32_0 : i32, i32
  }
  func.func @transform_12(%arg0: i32, %arg1: i32) -> (i32, i32) {
    %c0_i32 = arith.constant 0 : i32
    %c0_i32_0 = arith.constant 0 : i32
    %c0_i32_1 = arith.constant 0 : i32
    return %c0_i32, %c0_i32_0 : i32, i32
  }
  func.func @transform_13(%arg0: i32, %arg1: i32) -> (i32, i32) {
    %c0_i32 = arith.constant 0 : i32
    %c0_i32_0 = arith.constant 0 : i32
    %c0_i32_1 = arith.constant 0 : i32
    return %c0_i32, %c0_i32_0 : i32, i32
  }
  func.func @transform_14(%arg0: i32, %arg1: i32) -> (i32, i32, i32) {
    %c0_i32 = arith.constant 0 : i32
    %c0_i32_0 = arith.constant 0 : i32
    return %arg0, %arg1, %c0_i32 : i32, i32, i32
  }
}

</mosaic_0001>

<llo_original>
// kernel: tile.23
$region0: #{tile.23}
  #allocation0 [shape = 's32[1]{0}', space=sflag, size = 0x4, scoped, tag = 'scoped memory for tile.23']
  %s0 = inlined_call_operand.vmem [shape: f32[16], index: 0, kind: input, shape index: {}]
  %s1 = inlined_call_operand.vmem [shape: f32[32,16], index: 1, kind: output, shape index: {}]
  // Predicated region
  $region2: #{tile.23} parent=0 // pred_check
    _
  $region3: #{tile.23} parent=0 // pred_check_branch
    %3 = sbr.rel (0) target = $region5
  $region4: #{tile.23} parent=0 // pred_region
    _
  $region5: #{tile.23} parent=0 // pred_fallthru
    _
  %v4 = vld [vmem:[%s0] ss:$0 sm:$0xff]
  %5 = vst [vmem:[%s1] sm:$0xff] %v4
  %s6 = scalar_lea.vmem %s1, 8
  %7 = vst [vmem:[%s6] sm:$0xff] %v4
  %s8 = scalar_lea.vmem %s1, 16
  %9 = vst [vmem:[%s8] sm:$0xff] %v4
  %s10 = scalar_lea.vmem %s1, 24
  %11 = vst [vmem:[%s10] sm:$0xff] %v4

// kernel: tile.24
$region0: #{tile.24}
  %s0 = inlined_call_operand.vmem [shape: f32[32,16], index: 0, kind: input, shape index: {}]
  %s1 = inlined_call_operand.vmem [shape: f32[1,512], index: 1, kind: output, shape index: {}]
  $region1: #{tile.24} parent=0
    #allocation0 [shape = 'u8[16384]{0}', space=vmem, size = 0x4000, scoped, tag = 'scoped mem for output reshape']
    %v2 = vld [vmem:[%s0] ss:$8 sm:$0xf]
    %vm3 = vcmask 130048
    %4 = vst.msk [vmem:[#allocation0] ss:$8 sm:$0xf] %vm3, %v2
    %s5 = scalar_lea.vmem %s0, 7
    %v6 = vld [vmem:[%s5] ss:$8 sm:$0xf]
    %7 = vrot.lane.b32.xlu0 %v6, 112
    %v8 = vpop.permute.xlu0 %7
    %vm9 = vcmask 1048448
    %10 = vst.msk [vmem:[#allocation0] ss:$8 sm:$0xf] %vm9, %v8
    %s11 = scalar_lea.vmem %s0, 6
    %v12 = vld [vmem:[%s11] ss:$8 sm:$0xf]
    %13 = vrot.lane.b32.xlu0 %v12, 96
    %v14 = vpop.permute.xlu0 %13
    %vm15 = vcmask 917248
    %16 = vst.msk [vmem:[#allocation0] ss:$8 sm:$0xf] %vm15, %v14
    %s17 = scalar_lea.vmem %s0, 5
    %v18 = vld [vmem:[%s17] ss:$8 sm:$0xf]
    %19 = vrot.lane.b32.xlu0 %v18, 80
    %v20 = vpop.permute.xlu0 %19
    %vm21 = vcmask 786048
    %22 = vst.msk [vmem:[#allocation0] ss:$8 sm:$0xf] %vm21, %v20
    %s23 = scalar_lea.vmem %s0, 4
    %v24 = vld [vmem:[%s23] ss:$8 sm:$0xf]
    %25 = vrot.lane.b32.xlu0 %v24, 64
    %v26 = vpop.permute.xlu0 %25
    %vm27 = vcmask 654848
    %28 = vst.msk [vmem:[#allocation0] ss:$8 sm:$0xf] %vm27, %v26
    %s29 = scalar_lea.vmem %s0, 3
    %v30 = vld [vmem:[%s29] ss:$8 sm:$0xf]
    %31 = vrot.lane.b32.xlu0 %v30, 48
    %v32 = vpop.permute.xlu0 %31
    %vm33 = vcmask 523648
    %34 = vst.msk [vmem:[#allocation0] ss:$8 sm:$0xf] %vm33, %v32
    %s35 = scalar_lea.vmem %s0, 2
    %v36 = vld [vmem:[%s35] ss:$8 sm:$0xf]
    %37 = vrot.lane.b32.xlu0 %v36, 32
    %v38 = vpop.permute.xlu0 %37
    %vm39 = vcmask 392448
    %40 = vst.msk [vmem:[#allocation0] ss:$8 sm:$0xf] %vm39, %v38
    %s41 = scalar_lea.vmem %s0, 1
    %v42 = vld [vmem:[%s41] ss:$8 sm:$0xf]
    %43 = vrot.lane.b32.xlu0 %v42, 16
    %v44 = vpop.permute.xlu0 %43
    %vm45 = vcmask 261248
    %46 = vst.msk [vmem:[#allocation0] ss:$8 sm:$0xf] %vm45, %v44
    %s48 = sshll.u32 1, 1
    %s49 = ssub.s32 %s48, 1
    %v51 = vld [vmem:[#allocation0] sm:%s49]
    %s52 = sshll.u32 1, 1
    %s53 = ssub.s32 %s52, 1
    %54 = vst [vmem:[%s1] sm:%s53] %v51
    %s55 = scalar_lea.vmem [#allocation0], 8
    %v56 = vld [vmem:[%s55] sm:%s49]
    %s57 = sshll.u32 1, 1
    %s58 = ssub.s32 %s57, 1
    %s59 = scalar_lea.vmem %s1, 1
    %60 = vst [vmem:[%s59] sm:%s58] %v56
    %s61 = scalar_lea.vmem [#allocation0], 16
    %v62 = vld [vmem:[%s61] sm:%s49]
    %s63 = sshll.u32 1, 1
    %s64 = ssub.s32 %s63, 1
    %s65 = smul.addr 1, 2
    %s66 = scalar_lea.vmem %s1, %s65
    %67 = vst [vmem:[%s66] sm:%s64] %v62
    %s68 = scalar_lea.vmem [#allocation0], 24
    %v69 = vld [vmem:[%s68] sm:%s49]
    %s70 = sshll.u32 1, 1
    %s71 = ssub.s32 %s70, 1
    %s72 = smul.addr 1, 3
    %s73 = scalar_lea.vmem %s1, %s72
    %74 = vst [vmem:[%s73] sm:%s71] %v69

// kernel: tile.18
$region0: #{tile.18}
  #allocation0 [shape = 's32[1]{0}', space=sflag, size = 0x4, scoped, tag = 'scoped memory for tile.18']
  %s0 = inlined_call_operand.vmem [shape: f32[8], index: 0, kind: input, shape index: {}]
  %s1 = inlined_call_operand.vmem [shape: f32[32,8], index: 1, kind: output, shape index: {}]
  // Predicated region
  $region2: #{tile.18} parent=0 // pred_check
    _
  $region3: #{tile.18} parent=0 // pred_check_branch
    %3 = sbr.rel (0) target = $region5
  $region4: #{tile.18} parent=0 // pred_region
    _
  $region5: #{tile.18} parent=0 // pred_fallthru
    _
  %v4 = vld [vmem:[%s0] ss:$0 sm:$0xff]
  %5 = vst [vmem:[%s1] sm:$0xff] %v4
  %s6 = scalar_lea.vmem %s1, 8
  %7 = vst [vmem:[%s6] sm:$0xff] %v4
  %s8 = scalar_lea.vmem %s1, 16
  %9 = vst [vmem:[%s8] sm:$0xff] %v4
  %s10 = scalar_lea.vmem %s1, 24
  %11 = vst [vmem:[%s10] sm:$0xff] %v4

// kernel: tile.19
$region0: #{tile.19}
  %s0 = inlined_call_operand.vmem [shape: f32[32,8], index: 0, kind: input, shape index: {}]
  %s1 = inlined_call_operand.vmem [shape: f32[1,256], index: 1, kind: output, shape index: {}]
  $region1: #{tile.19} parent=0
    #allocation0 [shape = 'u8[8192]{0}', space=vmem, size = 0x2000, scoped, tag = 'scoped mem for output reshape']
    %s2 = smov 3
    %v3 = vld [vmem:[%s0] ss:$16 sm:%s2]
    %vm4 = vcmask 64512
    %5 = vst.msk [vmem:[#allocation0] ss:$8 sm:$0x3] %vm4, %v3
    %s6 = scalar_lea.vmem %s0, 15
    %s7 = smov 3
    %v8 = vld [vmem:[%s6] ss:$16 sm:%s7]
    %9 = vrot.lane.b32.xlu0 %v8, 120
    %v10 = vpop.permute.xlu0 %9
    %vm11 = vcmask 1048512
    %12 = vst.msk [vmem:[#allocation0] ss:$8 sm:$0x3] %vm11, %v10
    %s13 = scalar_lea.vmem %s0, 14
    %s14 = smov 3
    %v15 = vld [vmem:[%s13] ss:$16 sm:%s14]
    %16 = vrot.lane.b32.xlu0 %v15, 112
    %v17 = vpop.permute.xlu0 %16
    %vm18 = vcmask 982912
    %19 = vst.msk [vmem:[#allocation0] ss:$8 sm:$0x3] %vm18, %v17
    %s20 = scalar_lea.vmem %s0, 13
    %s21 = smov 3
    %v22 = vld [vmem:[%s20] ss:$16 sm:%s21]
    %23 = vrot.lane.b32.xlu0 %v22, 104
    %v24 = vpop.permute.xlu0 %23
    %vm25 = vcmask 917312
    %26 = vst.msk [vmem:[#allocation0] ss:$8 sm:$0x3] %vm25, %v24
    %s27 = scalar_lea.vmem %s0, 12
    %s28 = smov 3
    %v29 = vld [vmem:[%s27] ss:$16 sm:%s28]
    %30 = vrot.lane.b32.xlu0 %v29, 96
    %v31 = vpop.permute.xlu0 %30
    %vm32 = vcmask 851712
    %33 = vst.msk [vmem:[#allocation0] ss:$8 sm:$0x3] %vm32, %v31
    %s34 = scalar_lea.vmem %s0, 11
    %s35 = smov 3
    %v36 = vld [vmem:[%s34] ss:$16 sm:%s35]
    %37 = vrot.lane.b32.xlu0 %v36, 88
    %v38 = vpop.permute.xlu0 %37
    %vm39 = vcmask 786112
    %40 = vst.msk [vmem:[#allocation0] ss:$8 sm:$0x3] %vm39, %v38
    %s41 = scalar_lea.vmem %s0, 10
    %s42 = smov 3
    %v43 = vld [vmem:[%s41] ss:$16 sm:%s42]
    %44 = vrot.lane.b32.xlu0 %v43, 80
    %v45 = vpop.permute.xlu0 %44
    %vm46 = vcmask 720512
    %47 = vst.msk [vmem:[#allocation0] ss:$8 sm:$0x3] %vm46, %v45
    %s48 = scalar_lea.vmem %s0, 9
    %s49 = smov 3
    %v50 = vld [vmem:[%s48] ss:$16 sm:%s49]
    %51 = vrot.lane.b32.xlu0 %v50, 72
    %v52 = vpop.permute.xlu0 %51
    %vm53 = vcmask 654912
    %54 = vst.msk [vmem:[#allocation0] ss:$8 sm:$0x3] %vm53, %v52
    %s55 = scalar_lea.vmem %s0, 8
    %s56 = smov 3
    %v57 = vld [vmem:[%s55] ss:$16 sm:%s56]
    %58 = vrot.lane.b32.xlu0 %v57, 64
    %v59 = vpop.permute.xlu0 %58
    %vm60 = vcmask 589312
    %61 = vst.msk [vmem:[#allocation0] ss:$8 sm:$0x3] %vm60, %v59
    %s62 = scalar_lea.vmem %s0, 7
    %s63 = smov 3
    %v64 = vld [vmem:[%s62] ss:$16 sm:%s63]
    %65 = vrot.lane.b32.xlu0 %v64, 56
    %v66 = vpop.permute.xlu0 %65
    %vm67 = vcmask 523712
    %68 = vst.msk [vmem:[#allocation0] ss:$8 sm:$0x3] %vm67, %v66
    %s69 = scalar_lea.vmem %s0, 6
    %s70 = smov 3
    %v71 = vld [vmem:[%s69] ss:$16 sm:%s70]
    %72 = vrot.lane.b32.xlu0 %v71, 48
    %v73 = vpop.permute.xlu0 %72
    %vm74 = vcmask 458112
    %75 = vst.msk [vmem:[#allocation0] ss:$8 sm:$0x3] %vm74, %v73
    %s76 = scalar_lea.vmem %s0, 5
    %s77 = smov 3
    %v78 = vld [vmem:[%s76] ss:$16 sm:%s77]
    %79 = vrot.lane.b32.xlu0 %v78, 40
    %v80 = vpop.permute.xlu0 %79
    %vm81 = vcmask 392512
    %82 = vst.msk [vmem:[#allocation0] ss:$8 sm:$0x3] %vm81, %v80
    %s83 = scalar_lea.vmem %s0, 4
    %s84 = smov 3
    %v85 = vld [vmem:[%s83] ss:$16 sm:%s84]
    %86 = vrot.lane.b32.xlu0 %v85, 32
    %v87 = vpop.permute.xlu0 %86
    %vm88 = vcmask 326912
    %89 = vst.msk [vmem:[#allocation0] ss:$8 sm:$0x3] %vm88, %v87
    %s90 = scalar_lea.vmem %s0, 3
    %s91 = smov 3
    %v92 = vld [vmem:[%s90] ss:$16 sm:%s91]
    %93 = vrot.lane.b32.xlu0 %v92, 24
    %v94 = vpop.permute.xlu0 %93
    %vm95 = vcmask 261312
    %96 = vst.msk [vmem:[#allocation0] ss:$8 sm:$0x3] %vm95, %v94
    %s97 = scalar_lea.vmem %s0, 2
    %s98 = smov 3
    %v99 = vld [vmem:[%s97] ss:$16 sm:%s98]
    %100 = vrot.lane.b32.xlu0 %v99, 16
    %v101 = vpop.permute.xlu0 %100
    %vm102 = vcmask 195712
    %103 = vst.msk [vmem:[#allocation0] ss:$8 sm:$0x3] %vm102, %v101
    %s104 = scalar_lea.vmem %s0, 1
    %s105 = smov 3
    %v106 = vld [vmem:[%s104] ss:$16 sm:%s105]
    %107 = vrot.lane.b32.xlu0 %v106, 8
    %v108 = vpop.permute.xlu0 %107
    %vm109 = vcmask 130112
    %110 = vst.msk [vmem:[#allocation0] ss:$8 sm:$0x3] %vm109, %v108
    %s112 = sshll.u32 1, 1
    %s113 = ssub.s32 %s112, 1
    %v115 = vld [vmem:[#allocation0] sm:%s113]
    %s116 = sshll.u32 1, 1
    %s117 = ssub.s32 %s116, 1
    %118 = vst [vmem:[%s1] sm:%s117] %v115
    %s119 = scalar_lea.vmem [#allocation0], 8
    %v120 = vld [vmem:[%s119] sm:%s113]
    %s121 = sshll.u32 1, 1
    %s122 = ssub.s32 %s121, 1
    %s123 = scalar_lea.vmem %s1, 1
    %124 = vst [vmem:[%s123] sm:%s122] %v120

// kernel: decoder_block_forward.1
$region0: #{decoder_block_forward.1}
  #allocation0 [shape = 'u32[]', space=smem, size = 0x4, offset = 0x4, fixed_abs, tag = 'smem constant byte address 0x4 - core index']
  #allocation1 [shape = 'u32[144,128]{1,0:T(1,128)}', space=vmem, size = 0x12000, scoped, tag = 'internal scratch']
  %s0 = inlined_call_operand.vmem [shape: bf16[2,16,128], index: 0, kind: input, shape index: {}]
  %s1 = inlined_call_operand.vmem [shape: bf16[2,16,96], index: 1, kind: input, shape index: {}]
  %s2 = inlined_call_operand.vmem [shape: bf16[32,16], index: 2, kind: input, shape index: {}]
  %s3 = inlined_call_operand.vmem [shape: bf16[32,16], index: 3, kind: input, shape index: {}]
  %s4 = inlined_call_operand.vmem [shape: bf16[32,16], index: 4, kind: input, shape index: {}]
  %s5 = inlined_call_operand.vmem [shape: bf16[32,16], index: 5, kind: input, shape index: {}]
  %s6 = inlined_call_operand.vmem [shape: bf16[128,256], index: 6, kind: input, shape index: {}]
  %s7 = inlined_call_operand.vmem [shape: bf16[128,256], index: 7, kind: input, shape index: {}]
  %s8 = inlined_call_operand.vmem [shape: bf16[128,256], index: 8, kind: input, shape index: {}]
  %s9 = inlined_call_operand.vmem [shape: f32[1,256], index: 9, kind: input, shape index: {}]
  %s10 = inlined_call_operand.vmem [shape: bf16[256,512], index: 10, kind: input, shape index: {}]
  %s11 = inlined_call_operand.vmem [shape: f32[1,512], index: 11, kind: input, shape index: {}]
  %s12 = inlined_call_operand.vmem [shape: bf16[96,512], index: 12, kind: input, shape index: {}]
  %s13 = inlined_call_operand.vmem [shape: f32[1,512], index: 13, kind: input, shape index: {}]
  %s14 = inlined_call_operand.vmem [shape: f32[2,32,512], index: 14, kind: output, shape index: {}]
  %s15 = sld [smem:[#allocation0]]
  $region89: #{decoder_block_forward.1} parent=0
    _
  %s17 = ssub.s32 1, %s15
  %s18 = scalar_select 0, %s17, %s15
  loop: start=0, step=1, limit=6
  $region2: #{decoder_block_forward.1} parent=0 // loop_pre_header
    _
  $region3: #{decoder_block_forward.1} parent=0 // loop_header
    %s20 = sphi 0, %s24
    %p21 = scmp.ge.s32.totalorder %s20, 6
    %s27 = sphi 0, %s39
    %s28 = sphi 0, %s35
    %s29 = sphi 0, %s27
    %s30 = sphi 0, %s28
    %s31 = sphi 0, %s29
    %s32 = sphi 0, %s30
    %s42 = sphi 0, %s44
    %s45 = sphi 0, %s42
    %s46 = sphi 0, %s45
    %s62 = sphi 0, %s46
    %s68 = sphi 0, %s70
    %s71 = sphi 0, %s68
    %s72 = sphi 0, %s71
    %s88 = sphi 0, %s72
    %s94 = sphi 0, %s96
    %s97 = sphi 0, %s94
    %s98 = sphi 0, %s97
    %s114 = sphi 0, %s98
    %s120 = sphi 0, %s122
    %s123 = sphi 0, %s120
    %s124 = sphi 0, %s123
    %s140 = sphi 0, %s124
    %s146 = sphi 0, %s148
    %s149 = sphi 0, %s146
    %s150 = sphi 0, %s149
    %s166 = sphi 0, %s150
    %s172 = sphi 0, %s174
    %s175 = sphi 0, %s172
    %s176 = sphi 0, %s175
    %s192 = sphi 0, %s176
    %s196 = sphi 0, %s196
    %s198 = sphi 0, %s196
    %s199 = sphi 0, %s198
    %s213 = sphi 0, %s199
    %s217 = sphi 0, %s217
    %s219 = sphi 0, %s217
    %s220 = sphi 0, %s219
    %s234 = sphi 0, %s220
    %s238 = sphi 0, %s238
    %s240 = sphi 0, %s238
    %s241 = sphi 0, %s240
    %s255 = sphi 0, %s241
    %s259 = sphi 0, %s259
    %s261 = sphi 0, %s259
    %s262 = sphi 0, %s261
    %s276 = sphi 0, %s262
    %s280 = sphi 0, %s280
    %s282 = sphi 0, %s280
    %s283 = sphi 0, %s282
    %s297 = sphi 0, %s283
    %s301 = sphi 0, %s301
    %s303 = sphi 0, %s301
    %s304 = sphi 0, %s303
    %s318 = sphi 0, %s304
    %s322 = sphi 0, %s322
    %s324 = sphi 0, %s322
    %s325 = sphi 0, %s324
    %s339 = sphi 0, %s325
    %s343 = sphi 0, %s343
    %s345 = sphi 0, %s343
    %s346 = sphi 0, %s345
    %s360 = sphi 0, %s346
    %s368 = sphi 0, %s370
    %s371 = sphi 0, %s368
    %s372 = sphi 0, %s371
    %s388 = sphi 0, %s372
  $region4: #{decoder_block_forward.1} parent=0 // loop_header_branch
    %23 = sbr.rel (%p21) target = $region8
  $region5: #{decoder_block_forward.1} parent=0 // loop_body
    %s25 = ssub.s32 %s20, 1
    %s26 = ssub.s32 %s20, 2
    %s33 = sadd.s32 1, %s28
    %p34 = scmp.ge.s32.totalorder %s33, 2
    %s35 = scalar_select %p34, 0, %s33
    %s36 = sadd.s32 1, %s27
    %s37 = scalar_select %p34, %s36, %s27
    %p38 = scmp.ge.s32.totalorder %s37, 2
    %s39 = scalar_select %p38, 0, %s37
    %s40 = ssub.s32 %s27, %s39
    %p41 = scmp.eq.s32.totalorder %s40, 0
    %s43 = sadd.s32 %s42, 1
    %s44 = scalar_select %p41, %s42, %s43
    %p47 = pneg %p41
    %p48 = scmp.eq.s32.totalorder %s20, 3
    %p49 = por %p47, %p48
    %p50 = scmp.ne.s32.totalorder %s42, %s45
    %p51 = scmp.eq.s32.totalorder %s20, 0
    %p52 = por %p50, %p51
    %p53 = scmp.ne.s32.totalorder %s42, %s45
    %p54 = scmp.eq.s32.totalorder %s25, 3
    %p55 = por %p53, %p54
    %p56 = scmp.ne.s32.totalorder %s45, %s46
    %p57 = scmp.eq.s32.totalorder %s25, 0
    %p58 = por %p56, %p57
    %p59 = scmp.ne.s32.totalorder %s45, %s46
    %p60 = scmp.eq.s32.totalorder %s26, 3
    %p61 = por %p59, %p60
    %p63 = scmp.ne.s32.totalorder %s46, %s62
    %p64 = scmp.eq.s32.totalorder %s26, 0
    %p65 = por %p63, %p64
    %s66 = ssub.s32 %s27, %s39
    %p67 = scmp.eq.s32.totalorder %s66, 0
    %s69 = sadd.s32 %s68, 1
    %s70 = scalar_select %p67, %s68, %s69
    %p73 = pneg %p67
    %p74 = scmp.eq.s32.totalorder %s20, 3
    %p75 = por %p73, %p74
    %p76 = scmp.ne.s32.totalorder %s68, %s71
    %p77 = scmp.eq.s32.totalorder %s20, 0
    %p78 = por %p76, %p77
    %p79 = scmp.ne.s32.totalorder %s68, %s71
    %p80 = scmp.eq.s32.totalorder %s25, 3
    %p81 = por %p79, %p80
    %p82 = scmp.ne.s32.totalorder %s71, %s72
    %p83 = scmp.eq.s32.totalorder %s25, 0
    %p84 = por %p82, %p83
    %p85 = scmp.ne.s32.totalorder %s71, %s72
    %p86 = scmp.eq.s32.totalorder %s26, 3
    %p87 = por %p85, %p86
    %p89 = scmp.ne.s32.totalorder %s72, %s88
    %p90 = scmp.eq.s32.totalorder %s26, 0
    %p91 = por %p89, %p90
    %s92 = ssub.s32 %s28, %s35
    %p93 = scmp.eq.s32.totalorder %s92, 0
    %s95 = sadd.s32 %s94, 1
    %s96 = scalar_select %p93, %s94, %s95
    %p99 = pneg %p93
    %p100 = scmp.eq.s32.totalorder %s20, 3
    %p101 = por %p99, %p100
    %p102 = scmp.ne.s32.totalorder %s94, %s97
    %p103 = scmp.eq.s32.totalorder %s20, 0
    %p104 = por %p102, %p103
    %p105 = scmp.ne.s32.totalorder %s94, %s97
    %p106 = scmp.eq.s32.totalorder %s25, 3
    %p107 = por %p105, %p106
    %p108 = scmp.ne.s32.totalorder %s97, %s98
    %p109 = scmp.eq.s32.totalorder %s25, 0
    %p110 = por %p108, %p109
    %p111 = scmp.ne.s32.totalorder %s97, %s98
    %p112 = scmp.eq.s32.totalorder %s26, 3
    %p113 = por %p111, %p112
    %p115 = scmp.ne.s32.totalorder %s98, %s114
    %p116 = scmp.eq.s32.totalorder %s26, 0
    %p117 = por %p115, %p116
    %s118 = ssub.s32 %s28, %s35
    %p119 = scmp.eq.s32.totalorder %s118, 0
    %s121 = sadd.s32 %s120, 1
    %s122 = scalar_select %p119, %s120, %s121
    %p125 = pneg %p119
    %p126 = scmp.eq.s32.totalorder %s20, 3
    %p127 = por %p125, %p126
    %p128 = scmp.ne.s32.totalorder %s120, %s123
    %p129 = scmp.eq.s32.totalorder %s20, 0
    %p130 = por %p128, %p129
    %p131 = scmp.ne.s32.totalorder %s120, %s123
    %p132 = scmp.eq.s32.totalorder %s25, 3
    %p133 = por %p131, %p132
    %p134 = scmp.ne.s32.totalorder %s123, %s124
    %p135 = scmp.eq.s32.totalorder %s25, 0
    %p136 = por %p134, %p135
    %p137 = scmp.ne.s32.totalorder %s123, %s124
    %p138 = scmp.eq.s32.totalorder %s26, 3
    %p139 = por %p137, %p138
    %p141 = scmp.ne.s32.totalorder %s124, %s140
    %p142 = scmp.eq.s32.totalorder %s26, 0
    %p143 = por %p141, %p142
    %s144 = ssub.s32 %s28, %s35
    %p145 = scmp.eq.s32.totalorder %s144, 0
    %s147 = sadd.s32 %s146, 1
    %s148 = scalar_select %p145, %s146, %s147
    %p151 = pneg %p145
    %p152 = scmp.eq.s32.totalorder %s20, 3
    %p153 = por %p151, %p152
    %p154 = scmp.ne.s32.totalorder %s146, %s149
    %p155 = scmp.eq.s32.totalorder %s20, 0
    %p156 = por %p154, %p155
    %p157 = scmp.ne.s32.totalorder %s146, %s149
    %p158 = scmp.eq.s32.totalorder %s25, 3
    %p159 = por %p157, %p158
    %p160 = scmp.ne.s32.totalorder %s149, %s150
    %p161 = scmp.eq.s32.totalorder %s25, 0
    %p162 = por %p160, %p161
    %p163 = scmp.ne.s32.totalorder %s149, %s150
    %p164 = scmp.eq.s32.totalorder %s26, 3
    %p165 = por %p163, %p164
    %p167 = scmp.ne.s32.totalorder %s150, %s166
    %p168 = scmp.eq.s32.totalorder %s26, 0
    %p169 = por %p167, %p168
    %s170 = ssub.s32 %s28, %s35
    %p171 = scmp.eq.s32.totalorder %s170, 0
    %s173 = sadd.s32 %s172, 1
    %s174 = scalar_select %p171, %s172, %s173
    %p177 = pneg %p171
    %p178 = scmp.eq.s32.totalorder %s20, 3
    %p179 = por %p177, %p178
    %p180 = scmp.ne.s32.totalorder %s172, %s175
    %p181 = scmp.eq.s32.totalorder %s20, 0
    %p182 = por %p180, %p181
    %p183 = scmp.ne.s32.totalorder %s172, %s175
    %p184 = scmp.eq.s32.totalorder %s25, 3
    %p185 = por %p183, %p184
    %p186 = scmp.ne.s32.totalorder %s175, %s176
    %p187 = scmp.eq.s32.totalorder %s25, 0
    %p188 = por %p186, %p187
    %p189 = scmp.ne.s32.totalorder %s175, %s176
    %p190 = scmp.eq.s32.totalorder %s26, 3
    %p191 = por %p189, %p190
    %p193 = scmp.ne.s32.totalorder %s176, %s192
    %p194 = scmp.eq.s32.totalorder %s26, 0
    %p195 = por %p193, %p194
    %s197 = sadd.s32 %s196, 1
    %p200 = scmp.eq.s32.totalorder %s20, 3
    %p201 = scmp.ne.s32.totalorder %s196, %s198
    %p202 = scmp.eq.s32.totalorder %s20, 0
    %p203 = por %p201, %p202
    %p204 = scmp.ne.s32.totalorder %s196, %s198
    %p205 = scmp.eq.s32.totalorder %s25, 3
    %p206 = por %p204, %p205
    %p207 = scmp.ne.s32.totalorder %s198, %s199
    %p208 = scmp.eq.s32.totalorder %s25, 0
    %p209 = por %p207, %p208
    %p210 = scmp.ne.s32.totalorder %s198, %s199
    %p211 = scmp.eq.s32.totalorder %s26, 3
    %p212 = por %p210, %p211
    %p214 = scmp.ne.s32.totalorder %s199, %s213
    %p215 = scmp.eq.s32.totalorder %s26, 0
    %p216 = por %p214, %p215
    %s218 = sadd.s32 %s217, 1
    %p221 = scmp.eq.s32.totalorder %s20, 3
    %p222 = scmp.ne.s32.totalorder %s217, %s219
    %p223 = scmp.eq.s32.totalorder %s20, 0
    %p224 = por %p222, %p223
    %p225 = scmp.ne.s32.totalorder %s217, %s219
    %p226 = scmp.eq.s32.totalorder %s25, 3
    %p227 = por %p225, %p226
    %p228 = scmp.ne.s32.totalorder %s219, %s220
    %p229 = scmp.eq.s32.totalorder %s25, 0
    %p230 = por %p228, %p229
    %p231 = scmp.ne.s32.totalorder %s219, %s220
    %p232 = scmp.eq.s32.totalorder %s26, 3
    %p233 = por %p231, %p232
    %p235 = scmp.ne.s32.totalorder %s220, %s234
    %p236 = scmp.eq.s32.totalorder %s26, 0
    %p237 = por %p235, %p236
    %s239 = sadd.s32 %s238, 1
    %p242 = scmp.eq.s32.totalorder %s20, 3
    %p243 = scmp.ne.s32.totalorder %s238, %s240
    %p244 = scmp.eq.s32.totalorder %s20, 0
    %p245 = por %p243, %p244
    %p246 = scmp.ne.s32.totalorder %s238, %s240
    %p247 = scmp.eq.s32.totalorder %s25, 3
    %p248 = por %p246, %p247
    %p249 = scmp.ne.s32.totalorder %s240, %s241
    %p250 = scmp.eq.s32.totalorder %s25, 0
    %p251 = por %p249, %p250
    %p252 = scmp.ne.s32.totalorder %s240, %s241
    %p253 = scmp.eq.s32.totalorder %s26, 3
    %p254 = por %p252, %p253
    %p256 = scmp.ne.s32.totalorder %s241, %s255
    %p257 = scmp.eq.s32.totalorder %s26, 0
    %p258 = por %p256, %p257
    %s260 = sadd.s32 %s259, 1
    %p263 = scmp.eq.s32.totalorder %s20, 3
    %p264 = scmp.ne.s32.totalorder %s259, %s261
    %p265 = scmp.eq.s32.totalorder %s20, 0
    %p266 = por %p264, %p265
    %p267 = scmp.ne.s32.totalorder %s259, %s261
    %p268 = scmp.eq.s32.totalorder %s25, 3
    %p269 = por %p267, %p268
    %p270 = scmp.ne.s32.totalorder %s261, %s262
    %p271 = scmp.eq.s32.totalorder %s25, 0
    %p272 = por %p270, %p271
    %p273 = scmp.ne.s32.totalorder %s261, %s262
    %p274 = scmp.eq.s32.totalorder %s26, 3
    %p275 = por %p273, %p274
    %p277 = scmp.ne.s32.totalorder %s262, %s276
    %p278 = scmp.eq.s32.totalorder %s26, 0
    %p279 = por %p277, %p278
    %s281 = sadd.s32 %s280, 1
    %p284 = scmp.eq.s32.totalorder %s20, 3
    %p285 = scmp.ne.s32.totalorder %s280, %s282
    %p286 = scmp.eq.s32.totalorder %s20, 0
    %p287 = por %p285, %p286
    %p288 = scmp.ne.s32.totalorder %s280, %s282
    %p289 = scmp.eq.s32.totalorder %s25, 3
    %p290 = por %p288, %p289
    %p291 = scmp.ne.s32.totalorder %s282, %s283
    %p292 = scmp.eq.s32.totalorder %s25, 0
    %p293 = por %p291, %p292
    %p294 = scmp.ne.s32.totalorder %s282, %s283
    %p295 = scmp.eq.s32.totalorder %s26, 3
    %p296 = por %p294, %p295
    %p298 = scmp.ne.s32.totalorder %s283, %s297
    %p299 = scmp.eq.s32.totalorder %s26, 0
    %p300 = por %p298, %p299
    %s302 = sadd.s32 %s301, 1
    %p305 = scmp.eq.s32.totalorder %s20, 3
    %p306 = scmp.ne.s32.totalorder %s301, %s303
    %p307 = scmp.eq.s32.totalorder %s20, 0
    %p308 = por %p306, %p307
    %p309 = scmp.ne.s32.totalorder %s301, %s303
    %p310 = scmp.eq.s32.totalorder %s25, 3
    %p311 = por %p309, %p310
    %p312 = scmp.ne.s32.totalorder %s303, %s304
    %p313 = scmp.eq.s32.totalorder %s25, 0
    %p314 = por %p312, %p313
    %p315 = scmp.ne.s32.totalorder %s303, %s304
    %p316 = scmp.eq.s32.totalorder %s26, 3
    %p317 = por %p315, %p316
    %p319 = scmp.ne.s32.totalorder %s304, %s318
    %p320 = scmp.eq.s32.totalorder %s26, 0
    %p321 = por %p319, %p320
    %s323 = sadd.s32 %s322, 1
    %p326 = scmp.eq.s32.totalorder %s20, 3
    %p327 = scmp.ne.s32.totalorder %s322, %s324
    %p328 = scmp.eq.s32.totalorder %s20, 0
    %p329 = por %p327, %p328
    %p330 = scmp.ne.s32.totalorder %s322, %s324
    %p331 = scmp.eq.s32.totalorder %s25, 3
    %p332 = por %p330, %p331
    %p333 = scmp.ne.s32.totalorder %s324, %s325
    %p334 = scmp.eq.s32.totalorder %s25, 0
    %p335 = por %p333, %p334
    %p336 = scmp.ne.s32.totalorder %s324, %s325
    %p337 = scmp.eq.s32.totalorder %s26, 3
    %p338 = por %p336, %p337
    %p340 = scmp.ne.s32.totalorder %s325, %s339
    %p341 = scmp.eq.s32.totalorder %s26, 0
    %p342 = por %p340, %p341
    %s344 = sadd.s32 %s343, 1
    %p347 = scmp.eq.s32.totalorder %s20, 3
    %p348 = scmp.ne.s32.totalorder %s343, %s345
    %p349 = scmp.eq.s32.totalorder %s20, 0
    %p350 = por %p348, %p349
    %p351 = scmp.ne.s32.totalorder %s343, %s345
    %p352 = scmp.eq.s32.totalorder %s25, 3
    %p353 = por %p351, %p352
    %p354 = scmp.ne.s32.totalorder %s345, %s346
    %p355 = scmp.eq.s32.totalorder %s25, 0
    %p356 = por %p354, %p355
    %p357 = scmp.ne.s32.totalorder %s345, %s346
    %p358 = scmp.eq.s32.totalorder %s26, 3
    %p359 = por %p357, %p358
    %p361 = scmp.ne.s32.totalorder %s346, %s360
    %p362 = scmp.eq.s32.totalorder %s26, 0
    %p363 = por %p361, %p362
    %s364 = ssub.s32 %s27, %s39
    %s365 = ssub.s32 %s28, %s35
    %s366 = sor.u32 %s364, %s365
    %p367 = scmp.eq.s32.totalorder %s366, 0
    %s369 = sadd.s32 %s368, 1
    %s370 = scalar_select %p367, %s368, %s369
    %p373 = pneg %p367
    %p374 = scmp.eq.s32.totalorder %s20, 3
    %p375 = por %p373, %p374
    %p376 = scmp.ne.s32.totalorder %s368, %s371
    %p377 = scmp.eq.s32.totalorder %s20, 0
    %p378 = por %p376, %p377
    %p379 = scmp.ne.s32.totalorder %s368, %s371
    %p380 = scmp.eq.s32.totalorder %s25, 3
    %p381 = por %p379, %p380
    %p382 = scmp.ne.s32.totalorder %s371, %s372
    %p383 = scmp.eq.s32.totalorder %s25, 0
    %p384 = por %p382, %p383
    %p385 = scmp.ne.s32.totalorder %s371, %s372
    %p386 = scmp.eq.s32.totalorder %s26, 3
    %p387 = por %p385, %p386
    %p389 = scmp.ne.s32.totalorder %s372, %s388
    %p390 = scmp.eq.s32.totalorder %s26, 0
    %p391 = por %p389, %p390
    %p392 = scmp.le.s32.totalorder 1, %s20
    %p393 = scmp.lt.s32.totalorder %s20, 5
    %p394 = pnand %p392, %p393
    %p395 = pneg %p394
    // Predicated region
    $region9: #{decoder_block_forward.1} parent=5 // pred_check
      _
    $region10: #{decoder_block_forward.1} parent=5 // pred_check_branch
      %397 = sbr.rel (%p394) target = $region12
    $region11: #{decoder_block_forward.1} parent=5 // pred_region
      %s398 = ssub.s32 %s20, 1
      // Predicated region
      $region13: #{decoder_block_forward.1} parent=11 // pred_check
        %p399 = pneg %p209
      $region14: #{decoder_block_forward.1} parent=11 // pred_check_branch
        %401 = sbr.rel (%p399) target = $region16
      $region15: #{decoder_block_forward.1} parent=11 // pred_region
        _
      $region16: #{decoder_block_forward.1} parent=11 // pred_fallthru
        _
      // Predicated region
      $region17: #{decoder_block_forward.1} parent=11 // pred_check
        %p402 = pneg %p230
      $region18: #{decoder_block_forward.1} parent=11 // pred_check_branch
        %404 = sbr.rel (%p402) target = $region20
      $region19: #{decoder_block_forward.1} parent=11 // pred_region
        _
      $region20: #{decoder_block_forward.1} parent=11 // pred_fallthru
        _
      // Predicated region
      $region21: #{decoder_block_forward.1} parent=11 // pred_check
        %p405 = pneg %p251
      $region22: #{decoder_block_forward.1} parent=11 // pred_check_branch
        %407 = sbr.rel (%p405) target = $region24
      $region23: #{decoder_block_forward.1} parent=11 // pred_region
        _
      $region24: #{decoder_block_forward.1} parent=11 // pred_fallthru
        _
      // Predicated region
      $region25: #{decoder_block_forward.1} parent=11 // pred_check
        %p408 = pneg %p272
      $region26: #{decoder_block_forward.1} parent=11 // pred_check_branch
        %410 = sbr.rel (%p408) target = $region28
      $region27: #{decoder_block_forward.1} parent=11 // pred_region
        _
      $region28: #{decoder_block_forward.1} parent=11 // pred_fallthru
        _
      // Predicated region
      $region29: #{decoder_block_forward.1} parent=11 // pred_check
        %p411 = pneg %p293
      $region30: #{decoder_block_forward.1} parent=11 // pred_check_branch
        %413 = sbr.rel (%p411) target = $region32
      $region31: #{decoder_block_forward.1} parent=11 // pred_region
        _
      $region32: #{decoder_block_forward.1} parent=11 // pred_fallthru
        _
      // Predicated region
      $region33: #{decoder_block_forward.1} parent=11 // pred_check
        %p414 = pneg %p314
      $region34: #{decoder_block_forward.1} parent=11 // pred_check_branch
        %416 = sbr.rel (%p414) target = $region36
      $region35: #{decoder_block_forward.1} parent=11 // pred_region
        _
      $region36: #{decoder_block_forward.1} parent=11 // pred_fallthru
        _
      // Predicated region
      $region37: #{decoder_block_forward.1} parent=11 // pred_check
        %p417 = pneg %p335
      $region38: #{decoder_block_forward.1} parent=11 // pred_check_branch
        %419 = sbr.rel (%p417) target = $region40
      $region39: #{decoder_block_forward.1} parent=11 // pred_region
        _
      $region40: #{decoder_block_forward.1} parent=11 // pred_fallthru
        _
      // Predicated region
      $region41: #{decoder_block_forward.1} parent=11 // pred_check
        %p420 = pneg %p356
      $region42: #{decoder_block_forward.1} parent=11 // pred_check_branch
        %422 = sbr.rel (%p420) target = $region44
      $region43: #{decoder_block_forward.1} parent=11 // pred_region
        _
      $region44: #{decoder_block_forward.1} parent=11 // pred_fallthru
        _
    $region12: #{decoder_block_forward.1} parent=5 // pred_fallthru
      _
    %p423 = scmp.lt.s32.totalorder %s20, 4
    // Predicated region
    $region45: #{decoder_block_forward.1} parent=5 // pred_check
      %p424 = pneg %p423
    $region46: #{decoder_block_forward.1} parent=5 // pred_check_branch
      %426 = sbr.rel (%p424) target = $region48
    $region47: #{decoder_block_forward.1} parent=5 // pred_region
      // Predicated region
      $region49: #{decoder_block_forward.1} parent=47 // pred_check
        %p427 = pneg %p52
      $region50: #{decoder_block_forward.1} parent=47 // pred_check_branch
        %429 = sbr.rel (%p427) target = $region52
      $region51: #{decoder_block_forward.1} parent=47 // pred_region
        %p430 = scmp.lt.s32.totalorder %s27, 1
        %s431 = scalar_select %p430, %s27, 1
        %s432 = smul.addr %s431, 2
        %s433 = smul.addr %s432, 4
        %s434 = scalar_lea.vmem %s0, %s433
      $region52: #{decoder_block_forward.1} parent=47 // pred_fallthru
        _
      // Predicated region
      $region53: #{decoder_block_forward.1} parent=47 // pred_check
        %p435 = pneg %p78
      $region54: #{decoder_block_forward.1} parent=47 // pred_check_branch
        %437 = sbr.rel (%p435) target = $region56
      $region55: #{decoder_block_forward.1} parent=47 // pred_region
        %p438 = scmp.lt.s32.totalorder %s27, 1
        %s439 = scalar_select %p438, %s27, 1
        %s440 = smul.addr %s439, 2
        %s441 = smul.addr %s440, 4
        %s442 = scalar_lea.vmem %s1, %s441
      $region56: #{decoder_block_forward.1} parent=47 // pred_fallthru
        _
      // Predicated region
      $region57: #{decoder_block_forward.1} parent=47 // pred_check
        %p443 = pneg %p104
      $region58: #{decoder_block_forward.1} parent=47 // pred_check_branch
        %445 = sbr.rel (%p443) target = $region60
      $region59: #{decoder_block_forward.1} parent=47 // pred_region
        %s446 = smul.u32 2, %s28
        %p447 = scmp.lt.s32.totalorder %s446, 3
        %s448 = scalar_select %p447, %s446, 3
        %s449 = smul.addr %s448, 4
        %s450 = scalar_lea.vmem %s2, %s449
        %s451 = smul.u32 2, %s28
      $region60: #{decoder_block_forward.1} parent=47 // pred_fallthru
        _
      // Predicated region
      $region61: #{decoder_block_forward.1} parent=47 // pred_check
        %p452 = pneg %p130
      $region62: #{decoder_block_forward.1} parent=47 // pred_check_branch
        %454 = sbr.rel (%p452) target = $region64
      $region63: #{decoder_block_forward.1} parent=47 // pred_region
        %s455 = smul.u32 2, %s28
        %p456 = scmp.lt.s32.totalorder %s455, 3
        %s457 = scalar_select %p456, %s455, 3
        %s458 = smul.addr %s457, 4
        %s459 = scalar_lea.vmem %s3, %s458
        %s460 = smul.u32 2, %s28
      $region64: #{decoder_block_forward.1} parent=47 // pred_fallthru
        _
      // Predicated region
      $region65: #{decoder_block_forward.1} parent=47 // pred_check
        %p461 = pneg %p156
      $region66: #{decoder_block_forward.1} parent=47 // pred_check_branch
        %463 = sbr.rel (%p461) target = $region68
      $region67: #{decoder_block_forward.1} parent=47 // pred_region
        %s464 = smul.u32 2, %s28
        %p465 = scmp.lt.s32.totalorder %s464, 3
        %s466 = scalar_select %p465, %s464, 3
        %s467 = smul.addr %s466, 4
        %s468 = scalar_lea.vmem %s4, %s467
        %s469 = smul.u32 2, %s28
      $region68: #{decoder_block_forward.1} parent=47 // pred_fallthru
        _
      // Predicated region
      $region69: #{decoder_block_forward.1} parent=47 // pred_check
        %p470 = pneg %p182
      $region70: #{decoder_block_forward.1} parent=47 // pred_check_branch
        %472 = sbr.rel (%p470) target = $region72
      $region71: #{decoder_block_forward.1} parent=47 // pred_region
        %s473 = smul.u32 2, %s28
        %p474 = scmp.lt.s32.totalorder %s473, 3
        %s475 = scalar_select %p474, %s473, 3
        %s476 = smul.addr %s475, 4
        %s477 = scalar_lea.vmem %s5, %s476
        %s478 = smul.u32 2, %s28
      $region72: #{decoder_block_forward.1} parent=47 // pred_fallthru
        _
    $region48: #{decoder_block_forward.1} parent=5 // pred_fallthru
      _
    %p479 = scmp.le.s32.totalorder 1, %s20
    %p480 = scmp.lt.s32.totalorder %s20, 5
    %p481 = pnand %p479, %p480
    %p482 = pneg %p481
    // Predicated region
    $region73: #{decoder_block_forward.1} parent=5 // pred_check
      _
    $region74: #{decoder_block_forward.1} parent=5 // pred_check_branch
      %484 = sbr.rel (%p481) target = $region76
    $region75: #{decoder_block_forward.1} parent=5 // pred_region
      %s485 = ssub.s32 %s20, 1
      %p486 = scmp.lt.s32.totalorder %s29, 1
      %s487 = scalar_select %p486, %s29, 1
      %s488 = smul.addr %s487, 2
      %s489 = smul.addr %s488, 4
      %s490 = scalar_lea.vmem %s0, %s489
      %p491 = pneg %p58
      %p492 = pneg %p55
      %p493 = scmp.lt.s32.totalorder %s29, 1
      %s494 = scalar_select %p493, %s29, 1
      %s495 = smul.addr %s494, 2
      %s496 = smul.addr %s495, 4
      %s497 = scalar_lea.vmem %s1, %s496
      %p498 = pneg %p84
      %p499 = pneg %p81
      %s500 = smul.u32 2, %s30
      %p501 = scmp.lt.s32.totalorder %s500, 3
      %s502 = scalar_select %p501, %s500, 3
      %s503 = smul.addr %s502, 4
      %s504 = scalar_lea.vmem %s2, %s503
      %p505 = pneg %p110
      %p506 = pneg %p107
      %s507 = smul.u32 2, %s30
      %p508 = scmp.lt.s32.totalorder %s507, 3
      %s509 = scalar_select %p508, %s507, 3
      %s510 = smul.addr %s509, 4
      %s511 = scalar_lea.vmem %s3, %s510
      %p512 = pneg %p136
      %p513 = pneg %p133
      %s514 = smul.u32 2, %s30
      %p515 = scmp.lt.s32.totalorder %s514, 3
      %s516 = scalar_select %p515, %s514, 3
      %s517 = smul.addr %s516, 4
      %s518 = scalar_lea.vmem %s4, %s517
      %p519 = pneg %p162
      %p520 = pneg %p159
      %s521 = smul.u32 2, %s30
      %p522 = scmp.lt.s32.totalorder %s521, 3
      %s523 = scalar_select %p522, %s521, 3
      %s524 = smul.addr %s523, 4
      %s525 = scalar_lea.vmem %s5, %s524
      %p526 = pneg %p188
      %p527 = pneg %p185
      %p528 = pneg %p209
      %p529 = pneg %p206
      %p530 = pneg %p230
      %p531 = pneg %p227
      %p532 = pneg %p251
      %p533 = pneg %p248
      %p534 = pneg %p272
      %p535 = pneg %p269
      %p536 = pneg %p293
      %p537 = pneg %p290
      %p538 = pneg %p314
      %p539 = pneg %p311
      %p540 = pneg %p335
      %p541 = pneg %p332
      %p542 = pneg %p356
      %p543 = pneg %p353
      %p544 = pneg %p384
      %p545 = pneg %p381
      %s546 = smul.u32 2, %s30
      %p547 = scmp.lt.s32.totalorder %s29, 1
      %s548 = scalar_select %p547, %s29, 1
      %p549 = scmp.lt.s32.totalorder %s546, 3
      %s550 = scalar_select %p549, %s546, 3
      %s551 = smul.addr %s550, 4
      %s552 = smul.addr %s548, 16
      %s553 = sadd.s32 %s551, %s552
      %s554 = smul.addr %s553, 8
      %s555 = scalar_lea.vmem %s14, %s554
      %p556 = scmp.lt.s32.totalorder %s29, 1
      %s557 = scalar_select %p556, %s29, 1
      %s558 = smul.addr %s557, 2
      %s559 = smul.addr %s558, 4
      %s560 = scalar_lea.vmem %s0, %s559
      %p561 = scmp.lt.s32.totalorder %s29, 1
      %s562 = scalar_select %p561, %s29, 1
      %s563 = smul.addr %s562, 2
      %s564 = smul.addr %s563, 4
      %s565 = scalar_lea.vmem %s1, %s564
      %s566 = smul.u32 2, %s30
      %p567 = scmp.lt.s32.totalorder %s566, 3
      %s568 = scalar_select %p567, %s566, 3
      %s569 = smul.addr %s568, 4
      %s570 = scalar_lea.vmem %s2, %s569
      %s571 = smul.u32 2, %s30
      %s572 = smul.u32 2, %s30
      %p573 = scmp.lt.s32.totalorder %s572, 3
      %s574 = scalar_select %p573, %s572, 3
      %s575 = smul.addr %s574, 4
      %s576 = scalar_lea.vmem %s3, %s575
      %s577 = smul.u32 2, %s30
      %s578 = smul.u32 2, %s30
      %p579 = scmp.lt.s32.totalorder %s578, 3
      %s580 = scalar_select %p579, %s578, 3
      %s581 = smul.addr %s580, 4
      %s582 = scalar_lea.vmem %s4, %s581
      %s583 = smul.u32 2, %s30
      %s584 = smul.u32 2, %s30
      %p585 = scmp.lt.s32.totalorder %s584, 3
      %s586 = scalar_select %p585, %s584, 3
      %s587 = smul.addr %s586, 4
      %s588 = scalar_lea.vmem %s5, %s587
      %s589 = smul.u32 2, %s30
      %s590 = smul.u32 2, %s30
      %p591 = scmp.lt.s32.totalorder %s29, 1
      %s592 = scalar_select %p591, %s29, 1
      %p593 = scmp.lt.s32.totalorder %s590, 3
      %s594 = scalar_select %p593, %s590, 3
      %s595 = smul.addr %s594, 4
      %s596 = smul.addr %s592, 16
      %s597 = sadd.s32 %s595, %s596
      %s598 = smul.addr %s597, 8
      %s599 = scalar_lea.vmem %s14, %s598
      %s600 = smul.u32 2, %s30
      %v602 = vld [vmem:[%s560] sm:$0xf]
      %v603 = vld [vmem:[%s560 + $0x4] sm:$0xf]
      %v604 = vld [vmem:[%s6] sm:$0xff]
      %v605 = vld [vmem:[%s6 + $0x8] sm:$0xff]
      %v606 = vld [vmem:[%s6 + $0x10] sm:$0xff]
      %v607 = vld [vmem:[%s6 + $0x18] sm:$0xff]
      %v608 = vld [vmem:[%s6 + $0x20] sm:$0xff]
      %v609 = vld [vmem:[%s6 + $0x28] sm:$0xff]
      %v610 = vld [vmem:[%s6 + $0x30] sm:$0xff]
      %v611 = vld [vmem:[%s6 + $0x38] sm:$0xff]
      %v612 = vld [vmem:[%s6 + $0x40] sm:$0xff]
      %v613 = vld [vmem:[%s6 + $0x48] sm:$0xff]
      %v614 = vld [vmem:[%s6 + $0x50] sm:$0xff]
      %v615 = vld [vmem:[%s6 + $0x58] sm:$0xff]
      %v616 = vld [vmem:[%s6 + $0x60] sm:$0xff]
      %v617 = vld [vmem:[%s6 + $0x68] sm:$0xff]
      %v618 = vld [vmem:[%s6 + $0x70] sm:$0xff]
      %v619 = vld [vmem:[%s6 + $0x78] sm:$0xff]
      %v622 = vunpack.c.l.b16 %v602
      %v623 = vunpack.c.l.b16 %v603
      %v624 = vpack.c.b16 %v623, %v622
      %v642 = vunpack.c.l.b16 %v604
      %v643 = vunpack.c.h.b16 %v604
      %v644 = vunpack.c.l.b16 %v605
      %v645 = vunpack.c.h.b16 %v605
      %v646 = vunpack.c.l.b16 %v606
      %v647 = vunpack.c.h.b16 %v606
      %v648 = vunpack.c.l.b16 %v607
      %v649 = vunpack.c.h.b16 %v607
      %v650 = vunpack.c.l.b16 %v608
      %v651 = vunpack.c.h.b16 %v608
      %v652 = vunpack.c.l.b16 %v609
      %v653 = vunpack.c.h.b16 %v609
      %v654 = vunpack.c.l.b16 %v610
      %v655 = vunpack.c.h.b16 %v610
      %v656 = vunpack.c.l.b16 %v611
      %v657 = vunpack.c.h.b16 %v611
      %v658 = vunpack.c.l.b16 %v612
      %v659 = vunpack.c.h.b16 %v612
      %v660 = vunpack.c.l.b16 %v613
      %v661 = vunpack.c.h.b16 %v613
      %v662 = vunpack.c.l.b16 %v614
      %v663 = vunpack.c.h.b16 %v614
      %v664 = vunpack.c.l.b16 %v615
      %v665 = vunpack.c.h.b16 %v615
      %v666 = vunpack.c.l.b16 %v616
      %v667 = vunpack.c.h.b16 %v616
      %v668 = vunpack.c.l.b16 %v617
      %v669 = vunpack.c.h.b16 %v617
      %v670 = vunpack.c.l.b16 %v618
      %v671 = vunpack.c.h.b16 %v618
      %v672 = vunpack.c.l.b16 %v619
      %v673 = vunpack.c.h.b16 %v619
      %v674 = vpack.c.b16 %v644, %v642
      %v675 = vpack.c.b16 %v645, %v643
      %v676 = vpack.c.b16 %v648, %v646
      %v677 = vpack.c.b16 %v649, %v647
      %v678 = vpack.c.b16 %v652, %v650
      %v679 = vpack.c.b16 %v653, %v651
      %v680 = vpack.c.b16 %v656, %v654
      %v681 = vpack.c.b16 %v657, %v655
      %v682 = vpack.c.b16 %v660, %v658
      %v683 = vpack.c.b16 %v661, %v659
      %v684 = vpack.c.b16 %v664, %v662
      %v685 = vpack.c.b16 %v665, %v663
      %v686 = vpack.c.b16 %v668, %v666
      %v687 = vpack.c.b16 %v669, %v667
      %v688 = vpack.c.b16 %v672, %v670
      %v689 = vpack.c.b16 %v673, %v671
      %706 = vmatprep.subr.bf16.mxu0 %v689
      %707 = vmatpush1.bf16.msra.mxu0 %v688
      %708 = vmatprep.subr.bf16.mxu0 %v687
      %709 = vmatpush1.bf16.msra.mxu0 %v686
      %710 = vmatprep.subr.bf16.mxu0 %v685
      %711 = vmatpush1.bf16.msra.mxu0 %v684
      %712 = vmatprep.subr.bf16.mxu0 %v683
      %713 = vmatpush1.bf16.msra.mxu0 %v682
      %714 = vmatprep.subr.bf16.mxu0 %v681
      %715 = vmatpush1.bf16.msra.mxu0 %v680
      %716 = vmatprep.subr.bf16.mxu0 %v679
      %717 = vmatpush1.bf16.msra.mxu0 %v678
      %718 = vmatprep.subr.bf16.mxu0 %v677
      %719 = vmatpush1.bf16.msra.mxu0 %v676
      %720 = vmatprep.subr.bf16.mxu0 %v675
      %721 = vmatpush1.bf16.msra.mxu0 %v674
      %722 = vmatprep.subr.bf16.mxu0 0
      %723 = vmatpush2.bf16.msra.mxu0 0
      %724 = vmatprep.subr.bf16.mxu0 0
      %725 = vmatpush2.bf16.msra.mxu0 0
      %726 = vmatprep.subr.bf16.mxu0 0
      %727 = vmatpush2.bf16.msra.mxu0 0
      %728 = vmatprep.subr.bf16.mxu0 0
      %729 = vmatpush2.bf16.msra.mxu0 0
      %730 = vmatprep.subr.bf16.mxu0 0
      %731 = vmatpush2.bf16.msra.mxu0 0
      %732 = vmatprep.subr.bf16.mxu0 0
      %733 = vmatpush2.bf16.msra.mxu0 0
      %734 = vmatprep.subr.bf16.mxu0 0
      %735 = vmatpush2.bf16.msra.mxu0 0
      %736 = vmatprep.subr.bf16.mxu0 0
      %737 = vmatpush2.bf16.msra.mxu0 0
      %738 = vmatprep.mubr.bf16.mxu0 0
      %739 = vmatmul.mubr.bf16.gmra.mxu0 %v624
      %v740 = vpop.f32.mrf.mxu0
      %v741 = vadd.f32 0.0, %v740
      %v742 = vpop.f32.mrf.mxu0
      %v743 = vadd.f32 0.0, %v742
      %v744 = vpop.f32.mrf.mxu0
      %v745 = vadd.f32 0.0, %v744
      %v746 = vpop.f32.mrf.mxu0
      %v747 = vadd.f32 0.0, %v746
      %748 = vdwg.mxu0
      %v749 = vpack.c.bf16 %v745, %v741
      %v750 = vpack.c.bf16 %v747, %v743
      %v751 = vld [vmem:[%s570] sm:$0xf]
      %v752 = vld [vmem:[%s570 + $0x4] sm:$0xf]
      %v753 = vld [vmem:[%s7] sm:$0xff]
      %v754 = vld [vmem:[%s7 + $0x8] sm:$0xff]
      %v755 = vld [vmem:[%s7 + $0x10] sm:$0xff]
      %v756 = vld [vmem:[%s7 + $0x18] sm:$0xff]
      %v757 = vld [vmem:[%s7 + $0x20] sm:$0xff]
      %v758 = vld [vmem:[%s7 + $0x28] sm:$0xff]
      %v759 = vld [vmem:[%s7 + $0x30] sm:$0xff]
      %v760 = vld [vmem:[%s7 + $0x38] sm:$0xff]
      %v761 = vld [vmem:[%s7 + $0x40] sm:$0xff]
      %v762 = vld [vmem:[%s7 + $0x48] sm:$0xff]
      %v763 = vld [vmem:[%s7 + $0x50] sm:$0xff]
      %v764 = vld [vmem:[%s7 + $0x58] sm:$0xff]
      %v765 = vld [vmem:[%s7 + $0x60] sm:$0xff]
      %v766 = vld [vmem:[%s7 + $0x68] sm:$0xff]
      %v767 = vld [vmem:[%s7 + $0x70] sm:$0xff]
      %v768 = vld [vmem:[%s7 + $0x78] sm:$0xff]
      %v785 = vunpack.c.l.b16 %v753
      %v786 = vunpack.c.h.b16 %v753
      %v787 = vunpack.c.l.b16 %v754
      %v788 = vunpack.c.h.b16 %v754
      %v789 = vunpack.c.l.b16 %v755
      %v790 = vunpack.c.h.b16 %v755
      %v791 = vunpack.c.l.b16 %v756
      %v792 = vunpack.c.h.b16 %v756
      %v793 = vunpack.c.l.b16 %v757
      %v794 = vunpack.c.h.b16 %v757
      %v795 = vunpack.c.l.b16 %v758
      %v796 = vunpack.c.h.b16 %v758
      %v797 = vunpack.c.l.b16 %v759
      %v798 = vunpack.c.h.b16 %v759
      %v799 = vunpack.c.l.b16 %v760
      %v800 = vunpack.c.h.b16 %v760
      %v801 = vunpack.c.l.b16 %v761
      %v802 = vunpack.c.h.b16 %v761
      %v803 = vunpack.c.l.b16 %v762
      %v804 = vunpack.c.h.b16 %v762
      %v805 = vunpack.c.l.b16 %v763
      %v806 = vunpack.c.h.b16 %v763
      %v807 = vunpack.c.l.b16 %v764
      %v808 = vunpack.c.h.b16 %v764
      %v809 = vunpack.c.l.b16 %v765
      %v810 = vunpack.c.h.b16 %v765
      %v811 = vunpack.c.l.b16 %v766
      %v812 = vunpack.c.h.b16 %v766
      %v813 = vunpack.c.l.b16 %v767
      %v814 = vunpack.c.h.b16 %v767
      %v815 = vunpack.c.l.b16 %v768
      %v816 = vunpack.c.h.b16 %v768
      %v817 = vpack.c.b16 %v787, %v785
      %v818 = vpack.c.b16 %v788, %v786
      %v819 = vpack.c.b16 %v791, %v789
      %v820 = vpack.c.b16 %v792, %v790
      %v821 = vpack.c.b16 %v795, %v793
      %v822 = vpack.c.b16 %v796, %v794
      %v823 = vpack.c.b16 %v799, %v797
      %v824 = vpack.c.b16 %v800, %v798
      %v825 = vpack.c.b16 %v803, %v801
      %v826 = vpack.c.b16 %v804, %v802
      %v827 = vpack.c.b16 %v807, %v805
      %v828 = vpack.c.b16 %v808, %v806
      %v829 = vpack.c.b16 %v811, %v809
      %v830 = vpack.c.b16 %v812, %v810
      %v831 = vpack.c.b16 %v815, %v813
      %v832 = vpack.c.b16 %v816, %v814
      %849 = vmatprep.subr.bf16.mxu0 %v832
      %850 = vmatpush1.bf16.msra.mxu0 %v831
      %851 = vmatprep.subr.bf16.mxu0 %v830
      %852 = vmatpush1.bf16.msra.mxu0 %v829
      %853 = vmatprep.subr.bf16.mxu0 %v828
      %854 = vmatpush1.bf16.msra.mxu0 %v827
      %855 = vmatprep.subr.bf16.mxu0 %v826
      %856 = vmatpush1.bf16.msra.mxu0 %v825
      %857 = vmatprep.subr.bf16.mxu0 %v824
      %858 = vmatpush1.bf16.msra.mxu0 %v823
      %859 = vmatprep.subr.bf16.mxu0 %v822
      %860 = vmatpush1.bf16.msra.mxu0 %v821
      %861 = vmatprep.subr.bf16.mxu0 %v820
      %862 = vmatpush1.bf16.msra.mxu0 %v819
      %863 = vmatprep.subr.bf16.mxu0 %v818
      %864 = vmatpush1.bf16.msra.mxu0 %v817
      %865 = vmatprep.subr.bf16.mxu0 0
      %866 = vmatpush2.bf16.msra.mxu0 0
      %867 = vmatprep.subr.bf16.mxu0 0
      %868 = vmatpush2.bf16.msra.mxu0 0
      %869 = vmatprep.subr.bf16.mxu0 0
      %870 = vmatpush2.bf16.msra.mxu0 0
      %871 = vmatprep.subr.bf16.mxu0 0
      %872 = vmatpush2.bf16.msra.mxu0 0
      %873 = vmatprep.subr.bf16.mxu0 0
      %874 = vmatpush2.bf16.msra.mxu0 0
      %875 = vmatprep.subr.bf16.mxu0 0
      %876 = vmatpush2.bf16.msra.mxu0 0
      %877 = vmatprep.subr.bf16.mxu0 0
      %878 = vmatpush2.bf16.msra.mxu0 0
      %879 = vmatprep.subr.bf16.mxu0 0
      %880 = vmatpush2.bf16.msra.mxu0 0
      %881 = vmatprep.mubr.bf16.mxu0 0
      %882 = vmatmul.mubr.bf16.gmra.mxu0 %v624
      %v883 = vpop.f32.mrf.mxu0
      %v884 = vadd.f32 0.0, %v883
      %v885 = vpop.f32.mrf.mxu0
      %v886 = vadd.f32 0.0, %v885
      %v887 = vpop.f32.mrf.mxu0
      %v888 = vadd.f32 0.0, %v887
      %v889 = vpop.f32.mrf.mxu0
      %v890 = vadd.f32 0.0, %v889
      %891 = vdwg.mxu0
      %v892 = vpack.c.bf16 %v888, %v884
      %v893 = vpack.c.bf16 %v890, %v886
      %v894 = vld [vmem:[%s576] sm:$0xf]
      %v895 = vld [vmem:[%s576 + $0x4] sm:$0xf]
      %v898 = vunpack.c.l.b16 %v894
      %v899 = vunpack.c.l.b16 %v895
      %v900 = vpack.c.b16 %v899, %v898
      %vm901 = vcmask 130048
      %v903 = vsel %vm901, %v900, 0
      %905 = vmatprep.subr.bf16.mxu0 0
      %906 = vmatpush1.bf16.msra.mxu0 0
      %907 = vmatprep.subr.bf16.mxu0 0
      %908 = vmatpush1.bf16.msra.mxu0 0
      %909 = vmatprep.subr.bf16.mxu0 0
      %910 = vmatpush1.bf16.msra.mxu0 0
      %911 = vmatprep.subr.bf16.mxu0 0
      %912 = vmatpush1.bf16.msra.mxu0 0
      %913 = vmatprep.subr.bf16.mxu0 0
      %914 = vmatpush1.bf16.msra.mxu0 0
      %915 = vmatprep.subr.bf16.mxu0 0
      %916 = vmatpush1.bf16.msra.mxu0 0
      %917 = vmatprep.subr.bf16.mxu0 0
      %918 = vmatpush1.bf16.msra.mxu0 0
      %919 = vmatprep.subr.bf16.mxu0 %v893
      %920 = vmatpush1.bf16.msra.mxu0 %v892
      %921 = vmatprep.subr.bf16.mxu0 0
      %922 = vmatpush2.bf16.msra.mxu0 0
      %923 = vmatprep.subr.bf16.mxu0 0
      %924 = vmatpush2.bf16.msra.mxu0 0
      %925 = vmatprep.subr.bf16.mxu0 0
      %926 = vmatpush2.bf16.msra.mxu0 0
      %927 = vmatprep.subr.bf16.mxu0 0
      %928 = vmatpush2.bf16.msra.mxu0 0
      %929 = vmatprep.subr.bf16.mxu0 0
      %930 = vmatpush2.bf16.msra.mxu0 0
      %931 = vmatprep.subr.bf16.mxu0 0
      %932 = vmatpush2.bf16.msra.mxu0 0
      %933 = vmatprep.subr.bf16.mxu0 0
      %934 = vmatpush2.bf16.msra.mxu0 0
      %935 = vmatprep.subr.bf16.mxu0 0
      %936 = vmatpush2.bf16.msra.mxu0 0
      %937 = vmatprep.mubr.bf16.mxu0 0
      %938 = vmatmul.mubr.bf16.gmra.mxu0 %v903
      %v939 = vpop.f32.mrf.mxu0
      %v940 = vadd.f32 0.0, %v939
      %v941 = vpop.f32.mrf.mxu0
      %v942 = vadd.f32 0.0, %v941
      %v943 = vpop.f32.mrf.mxu0
      %v944 = vadd.f32 0.0, %v943
      %v945 = vpop.f32.mrf.mxu0
      %v946 = vadd.f32 0.0, %v945
      %947 = vdwg.mxu0
      %v950 = vunpack.c.l.b16 %v751
      %v951 = vunpack.c.l.b16 %v752
      %v952 = vpack.c.b16 %v951, %v950
      %v954 = vsel %vm901, %v952, 0
      %956 = vmatprep.subr.bf16.mxu0 0
      %957 = vmatpush1.bf16.msra.mxu0 0
      %958 = vmatprep.subr.bf16.mxu0 0
      %959 = vmatpush1.bf16.msra.mxu0 0
      %960 = vmatprep.subr.bf16.mxu0 0
      %961 = vmatpush1.bf16.msra.mxu0 0
      %962 = vmatprep.subr.bf16.mxu0 0
      %963 = vmatpush1.bf16.msra.mxu0 0
      %964 = vmatprep.subr.bf16.mxu0 0
      %965 = vmatpush1.bf16.msra.mxu0 0
      %966 = vmatprep.subr.bf16.mxu0 0
      %967 = vmatpush1.bf16.msra.mxu0 0
      %968 = vmatprep.subr.bf16.mxu0 0
      %969 = vmatpush1.bf16.msra.mxu0 0
      %970 = vmatprep.subr.bf16.mxu0 %v750
      %971 = vmatpush1.bf16.msra.mxu0 %v749
      %972 = vmatprep.subr.bf16.mxu0 0
      %973 = vmatpush2.bf16.msra.mxu0 0
      %974 = vmatprep.subr.bf16.mxu0 0
      %975 = vmatpush2.bf16.msra.mxu0 0
      %976 = vmatprep.subr.bf16.mxu0 0
      %977 = vmatpush2.bf16.msra.mxu0 0
      %978 = vmatprep.subr.bf16.mxu0 0
      %979 = vmatpush2.bf16.msra.mxu0 0
      %980 = vmatprep.subr.bf16.mxu0 0
      %981 = vmatpush2.bf16.msra.mxu0 0
      %982 = vmatprep.subr.bf16.mxu0 0
      %983 = vmatpush2.bf16.msra.mxu0 0
      %984 = vmatprep.subr.bf16.mxu0 0
      %985 = vmatpush2.bf16.msra.mxu0 0
      %986 = vmatprep.subr.bf16.mxu0 0
      %987 = vmatpush2.bf16.msra.mxu0 0
      %988 = vmatprep.mubr.bf16.mxu0 0
      %989 = vmatmul.mubr.bf16.gmra.mxu0 %v954
      %v990 = vpop.f32.mrf.mxu0
      %v991 = vadd.f32 %v940, %v990
      %v992 = vpop.f32.mrf.mxu0
      %v993 = vadd.f32 %v942, %v992
      %v994 = vpop.f32.mrf.mxu0
      %v995 = vadd.f32 %v944, %v994
      %v996 = vpop.f32.mrf.mxu0
      %v997 = vadd.f32 %v946, %v996
      %998 = vdwg.mxu0
      %v999 = vld [vmem:[%s8] sm:$0xff]
      %v1000 = vld [vmem:[%s8 + $0x8] sm:$0xff]
      %v1001 = vld [vmem:[%s8 + $0x10] sm:$0xff]
      %v1002 = vld [vmem:[%s8 + $0x18] sm:$0xff]
      %v1003 = vld [vmem:[%s8 + $0x20] sm:$0xff]
      %v1004 = vld [vmem:[%s8 + $0x28] sm:$0xff]
      %v1005 = vld [vmem:[%s8 + $0x30] sm:$0xff]
      %v1006 = vld [vmem:[%s8 + $0x38] sm:$0xff]
      %v1007 = vld [vmem:[%s8 + $0x40] sm:$0xff]
      %v1008 = vld [vmem:[%s8 + $0x48] sm:$0xff]
      %v1009 = vld [vmem:[%s8 + $0x50] sm:$0xff]
      %v1010 = vld [vmem:[%s8 + $0x58] sm:$0xff]
      %v1011 = vld [vmem:[%s8 + $0x60] sm:$0xff]
      %v1012 = vld [vmem:[%s8 + $0x68] sm:$0xff]
      %v1013 = vld [vmem:[%s8 + $0x70] sm:$0xff]
      %v1014 = vld [vmem:[%s8 + $0x78] sm:$0xff]
      %v1031 = vunpack.c.l.b16 %v999
      %v1032 = vunpack.c.h.b16 %v999
      %v1033 = vunpack.c.l.b16 %v1000
      %v1034 = vunpack.c.h.b16 %v1000
      %v1035 = vunpack.c.l.b16 %v1001
      %v1036 = vunpack.c.h.b16 %v1001
      %v1037 = vunpack.c.l.b16 %v1002
      %v1038 = vunpack.c.h.b16 %v1002
      %v1039 = vunpack.c.l.b16 %v1003
      %v1040 = vunpack.c.h.b16 %v1003
      %v1041 = vunpack.c.l.b16 %v1004
      %v1042 = vunpack.c.h.b16 %v1004
      %v1043 = vunpack.c.l.b16 %v1005
      %v1044 = vunpack.c.h.b16 %v1005
      %v1045 = vunpack.c.l.b16 %v1006
      %v1046 = vunpack.c.h.b16 %v1006
      %v1047 = vunpack.c.l.b16 %v1007
      %v1048 = vunpack.c.h.b16 %v1007
      %v1049 = vunpack.c.l.b16 %v1008
      %v1050 = vunpack.c.h.b16 %v1008
      %v1051 = vunpack.c.l.b16 %v1009
      %v1052 = vunpack.c.h.b16 %v1009
      %v1053 = vunpack.c.l.b16 %v1010
      %v1054 = vunpack.c.h.b16 %v1010
      %v1055 = vunpack.c.l.b16 %v1011
      %v1056 = vunpack.c.h.b16 %v1011
      %v1057 = vunpack.c.l.b16 %v1012
      %v1058 = vunpack.c.h.b16 %v1012
      %v1059 = vunpack.c.l.b16 %v1013
      %v1060 = vunpack.c.h.b16 %v1013
      %v1061 = vunpack.c.l.b16 %v1014
      %v1062 = vunpack.c.h.b16 %v1014
      %v1063 = vpack.c.b16 %v1033, %v1031
      %v1064 = vpack.c.b16 %v1034, %v1032
      %v1065 = vpack.c.b16 %v1037, %v1035
      %v1066 = vpack.c.b16 %v1038, %v1036
      %v1067 = vpack.c.b16 %v1041, %v1039
      %v1068 = vpack.c.b16 %v1042, %v1040
      %v1069 = vpack.c.b16 %v1045, %v1043
      %v1070 = vpack.c.b16 %v1046, %v1044
      %v1071 = vpack.c.b16 %v1049, %v1047
      %v1072 = vpack.c.b16 %v1050, %v1048
      %v1073 = vpack.c.b16 %v1053, %v1051
      %v1074 = vpack.c.b16 %v1054, %v1052
      %v1075 = vpack.c.b16 %v1057, %v1055
      %v1076 = vpack.c.b16 %v1058, %v1056
      %v1077 = vpack.c.b16 %v1061, %v1059
      %v1078 = vpack.c.b16 %v1062, %v1060
      %1095 = vmatprep.subr.bf16.mxu0 %v1078
      %1096 = vmatpush1.bf16.msra.mxu0 %v1077
      %1097 = vmatprep.subr.bf16.mxu0 %v1076
      %1098 = vmatpush1.bf16.msra.mxu0 %v1075
      %1099 = vmatprep.subr.bf16.mxu0 %v1074
      %1100 = vmatpush1.bf16.msra.mxu0 %v1073
      %1101 = vmatprep.subr.bf16.mxu0 %v1072
      %1102 = vmatpush1.bf16.msra.mxu0 %v1071
      %1103 = vmatprep.subr.bf16.mxu0 %v1070
      %1104 = vmatpush1.bf16.msra.mxu0 %v1069
      %1105 = vmatprep.subr.bf16.mxu0 %v1068
      %1106 = vmatpush1.bf16.msra.mxu0 %v1067
      %1107 = vmatprep.subr.bf16.mxu0 %v1066
      %1108 = vmatpush1.bf16.msra.mxu0 %v1065
      %1109 = vmatprep.subr.bf16.mxu0 %v1064
      %1110 = vmatpush1.bf16.msra.mxu0 %v1063
      %1111 = vmatprep.subr.bf16.mxu0 0
      %1112 = vmatpush2.bf16.msra.mxu0 0
      %1113 = vmatprep.subr.bf16.mxu0 0
      %1114 = vmatpush2.bf16.msra.mxu0 0
      %1115 = vmatprep.subr.bf16.mxu0 0
      %1116 = vmatpush2.bf16.msra.mxu0 0
      %1117 = vmatprep.subr.bf16.mxu0 0
      %1118 = vmatpush2.bf16.msra.mxu0 0
      %1119 = vmatprep.subr.bf16.mxu0 0
      %1120 = vmatpush2.bf16.msra.mxu0 0
      %1121 = vmatprep.subr.bf16.mxu0 0
      %1122 = vmatpush2.bf16.msra.mxu0 0
      %1123 = vmatprep.subr.bf16.mxu0 0
      %1124 = vmatpush2.bf16.msra.mxu0 0
      %1125 = vmatprep.subr.bf16.mxu0 0
      %1126 = vmatpush2.bf16.msra.mxu0 0
      %1127 = vmatprep.mubr.bf16.mxu0 0
      %1128 = vmatmul.mubr.bf16.gmra.mxu0 %v624
      %v1129 = vpop.f32.mrf.mxu0
      %v1130 = vadd.f32 0.0, %v1129
      %v1131 = vpop.f32.mrf.mxu0
      %v1132 = vadd.f32 0.0, %v1131
      %v1133 = vpop.f32.mrf.mxu0
      %v1134 = vadd.f32 0.0, %v1133
      %v1135 = vpop.f32.mrf.mxu0
      %v1136 = vadd.f32 0.0, %v1135
      %1137 = vdwg.mxu0
      %v1138 = vpack.c.bf16 %v1134, %v1130
      %v1139 = vpack.c.bf16 %v1136, %v1132
      %v1140 = vld [vmem:[%s582] sm:$0xf]
      %v1141 = vld [vmem:[%s582 + $0x4] sm:$0xf]
      %v1144 = vunpack.c.l.b16 %v1140
      %v1145 = vunpack.c.l.b16 %v1141
      %v1146 = vpack.c.b16 %v1145, %v1144
      %v1148 = vsel %vm901, %v1146, 0
      %1150 = vmatprep.subr.bf16.mxu0 0
      %1151 = vmatpush1.bf16.msra.mxu0 0
      %1152 = vmatprep.subr.bf16.mxu0 0
      %1153 = vmatpush1.bf16.msra.mxu0 0
      %1154 = vmatprep.subr.bf16.mxu0 0
      %1155 = vmatpush1.bf16.msra.mxu0 0
      %1156 = vmatprep.subr.bf16.mxu0 0
      %1157 = vmatpush1.bf16.msra.mxu0 0
      %1158 = vmatprep.subr.bf16.mxu0 0
      %1159 = vmatpush1.bf16.msra.mxu0 0
      %1160 = vmatprep.subr.bf16.mxu0 0
      %1161 = vmatpush1.bf16.msra.mxu0 0
      %1162 = vmatprep.subr.bf16.mxu0 0
      %1163 = vmatpush1.bf16.msra.mxu0 0
      %1164 = vmatprep.subr.bf16.mxu0 %v1139
      %1165 = vmatpush1.bf16.msra.mxu0 %v1138
      %1166 = vmatprep.subr.bf16.mxu0 0
      %1167 = vmatpush2.bf16.msra.mxu0 0
      %1168 = vmatprep.subr.bf16.mxu0 0
      %1169 = vmatpush2.bf16.msra.mxu0 0
      %1170 = vmatprep.subr.bf16.mxu0 0
      %1171 = vmatpush2.bf16.msra.mxu0 0
      %1172 = vmatprep.subr.bf16.mxu0 0
      %1173 = vmatpush2.bf16.msra.mxu0 0
      %1174 = vmatprep.subr.bf16.mxu0 0
      %1175 = vmatpush2.bf16.msra.mxu0 0
      %1176 = vmatprep.subr.bf16.mxu0 0
      %1177 = vmatpush2.bf16.msra.mxu0 0
      %1178 = vmatprep.subr.bf16.mxu0 0
      %1179 = vmatpush2.bf16.msra.mxu0 0
      %1180 = vmatprep.subr.bf16.mxu0 0
      %1181 = vmatpush2.bf16.msra.mxu0 0
      %1182 = vmatprep.mubr.bf16.mxu0 0
      %1183 = vmatmul.mubr.bf16.gmra.mxu0 %v1148
      %v1184 = vpop.f32.mrf.mxu0
      %v1185 = vadd.f32 0.0, %v1184
      %v1186 = vpop.f32.mrf.mxu0
      %v1187 = vadd.f32 0.0, %v1186
      %v1188 = vpop.f32.mrf.mxu0
      %v1189 = vadd.f32 0.0, %v1188
      %v1190 = vpop.f32.mrf.mxu0
      %v1191 = vadd.f32 0.0, %v1190
      %1192 = vdwg.mxu0
      %v1193 = vadd.f32 %v991, %v1185
      %v1194 = vadd.f32 %v993, %v1187
      %v1195 = vadd.f32 %v995, %v1189
      %v1196 = vadd.f32 %v997, %v1191
      %v1197 = vld [vmem:[%s9] sm:$0x3]
      %v1199 = vlaneseq
      %v1200 = vshrl.u32 %v1199, 7
      %v1201 = vsub.s32 0, %v1200
      %v1202 = vrot.slane %v1197, %v1201
      %v1203 = vlaneseq
      %v1204 = vshrl.u32 %v1203, 7
      %v1205 = vsub.s32 1, %v1204
      %v1206 = vrot.slane %v1197, %v1205
      %v1209 = vadd.f32 %v1193, %v1202
      %v1210 = vadd.f32 %v1194, %v1206
      %v1211 = vadd.f32 %v1195, %v1202
      %v1212 = vadd.f32 %v1196, %v1206
      %v1213 = vmax.f32 %v1209, 0.0
      %v1214 = vmax.f32 %v1210, 0.0
      %v1215 = vmax.f32 %v1211, 0.0
      %v1216 = vmax.f32 %v1212, 0.0
      %v1217 = vpack.c.bf16 %v1215, %v1213
      %v1218 = vpack.c.bf16 %v1216, %v1214
      %v1219 = vld [vmem:[%s10] sm:$0xff]
      %v1220 = vld [vmem:[%s10 + $0x8] sm:$0xff]
      %v1221 = vld [vmem:[%s10 + $0x10] sm:$0xff]
      %v1222 = vld [vmem:[%s10 + $0x18] sm:$0xff]
      %v1223 = vld [vmem:[%s10 + $0x20] sm:$0xff]
      %v1224 = vld [vmem:[%s10 + $0x28] sm:$0xff]
      %v1225 = vld [vmem:[%s10 + $0x30] sm:$0xff]
      %v1226 = vld [vmem:[%s10 + $0x38] sm:$0xff]
      %v1227 = vld [vmem:[%s10 + $0x40] sm:$0xff]
      %v1228 = vld [vmem:[%s10 + $0x48] sm:$0xff]
      %v1229 = vld [vmem:[%s10 + $0x50] sm:$0xff]
      %v1230 = vld [vmem:[%s10 + $0x58] sm:$0xff]
      %v1231 = vld [vmem:[%s10 + $0x60] sm:$0xff]
      %v1232 = vld [vmem:[%s10 + $0x68] sm:$0xff]
      %v1233 = vld [vmem:[%s10 + $0x70] sm:$0xff]
      %v1234 = vld [vmem:[%s10 + $0x78] sm:$0xff]
      %v1235 = vld [vmem:[%s10 + $0x80] sm:$0xff]
      %v1236 = vld [vmem:[%s10 + $0x88] sm:$0xff]
      %v1237 = vld [vmem:[%s10 + $0x90] sm:$0xff]
      %v1238 = vld [vmem:[%s10 + $0x98] sm:$0xff]
      %v1239 = vld [vmem:[%s10 + $0xa0] sm:$0xff]
      %v1240 = vld [vmem:[%s10 + $0xa8] sm:$0xff]
      %v1241 = vld [vmem:[%s10 + $0xb0] sm:$0xff]
      %v1242 = vld [vmem:[%s10 + $0xb8] sm:$0xff]
      %v1243 = vld [vmem:[%s10 + $0xc0] sm:$0xff]
      %v1244 = vld [vmem:[%s10 + $0xc8] sm:$0xff]
      %v1245 = vld [vmem:[%s10 + $0xd0] sm:$0xff]
      %v1246 = vld [vmem:[%s10 + $0xd8] sm:$0xff]
      %v1247 = vld [vmem:[%s10 + $0xe0] sm:$0xff]
      %v1248 = vld [vmem:[%s10 + $0xe8] sm:$0xff]
      %v1249 = vld [vmem:[%s10 + $0xf0] sm:$0xff]
      %v1250 = vld [vmem:[%s10 + $0xf8] sm:$0xff]
      %v1251 = vld [vmem:[%s10 + $0x100] sm:$0xff]
      %v1252 = vld [vmem:[%s10 + $0x108] sm:$0xff]
      %v1253 = vld [vmem:[%s10 + $0x110] sm:$0xff]
      %v1254 = vld [vmem:[%s10 + $0x118] sm:$0xff]
      %v1255 = vld [vmem:[%s10 + $0x120] sm:$0xff]
      %v1256 = vld [vmem:[%s10 + $0x128] sm:$0xff]
      %v1257 = vld [vmem:[%s10 + $0x130] sm:$0xff]
      %v1258 = vld [vmem:[%s10 + $0x138] sm:$0xff]
      %v1259 = vld [vmem:[%s10 + $0x140] sm:$0xff]
      %v1260 = vld [vmem:[%s10 + $0x148] sm:$0xff]
      %v1261 = vld [vmem:[%s10 + $0x150] sm:$0xff]
      %v1262 = vld [vmem:[%s10 + $0x158] sm:$0xff]
      %v1263 = vld [vmem:[%s10 + $0x160] sm:$0xff]
      %v1264 = vld [vmem:[%s10 + $0x168] sm:$0xff]
      %v1265 = vld [vmem:[%s10 + $0x170] sm:$0xff]
      %v1266 = vld [vmem:[%s10 + $0x178] sm:$0xff]
      %v1267 = vld [vmem:[%s10 + $0x180] sm:$0xff]
      %v1268 = vld [vmem:[%s10 + $0x188] sm:$0xff]
      %v1269 = vld [vmem:[%s10 + $0x190] sm:$0xff]
      %v1270 = vld [vmem:[%s10 + $0x198] sm:$0xff]
      %v1271 = vld [vmem:[%s10 + $0x1a0] sm:$0xff]
      %v1272 = vld [vmem:[%s10 + $0x1a8] sm:$0xff]
      %v1273 = vld [vmem:[%s10 + $0x1b0] sm:$0xff]
      %v1274 = vld [vmem:[%s10 + $0x1b8] sm:$0xff]
      %v1275 = vld [vmem:[%s10 + $0x1c0] sm:$0xff]
      %v1276 = vld [vmem:[%s10 + $0x1c8] sm:$0xff]
      %v1277 = vld [vmem:[%s10 + $0x1d0] sm:$0xff]
      %v1278 = vld [vmem:[%s10 + $0x1d8] sm:$0xff]
      %v1279 = vld [vmem:[%s10 + $0x1e0] sm:$0xff]
      %v1280 = vld [vmem:[%s10 + $0x1e8] sm:$0xff]
      %v1281 = vld [vmem:[%s10 + $0x1f0] sm:$0xff]
      %v1282 = vld [vmem:[%s10 + $0x1f8] sm:$0xff]
      %v1283 = vld [vmem:[%s11] sm:$0xf]
      %v1285 = vlaneseq
      %v1286 = vshrl.u32 %v1285, 7
      %v1287 = vsub.s32 0, %v1286
      %v1288 = vrot.slane %v1283, %v1287
      %v1289 = vlaneseq
      %v1290 = vshrl.u32 %v1289, 7
      %v1291 = vsub.s32 1, %v1290
      %v1292 = vrot.slane %v1283, %v1291
      %v1293 = vlaneseq
      %v1294 = vshrl.u32 %v1293, 7
      %v1295 = vsub.s32 2, %v1294
      %v1296 = vrot.slane %v1283, %v1295
      %v1297 = vlaneseq
      %v1298 = vshrl.u32 %v1297, 7
      %v1299 = vsub.s32 3, %v1298
      %v1300 = vrot.slane %v1283, %v1299
      %v1369 = vunpack.c.l.b16 %v1219
      %v1370 = vunpack.c.h.b16 %v1219
      %v1371 = vunpack.c.l.b16 %v1220
      %v1372 = vunpack.c.h.b16 %v1220
      %v1373 = vunpack.c.l.b16 %v1221
      %v1374 = vunpack.c.h.b16 %v1221
      %v1375 = vunpack.c.l.b16 %v1222
      %v1376 = vunpack.c.h.b16 %v1222
      %v1377 = vunpack.c.l.b16 %v1223
      %v1378 = vunpack.c.h.b16 %v1223
      %v1379 = vunpack.c.l.b16 %v1224
      %v1380 = vunpack.c.h.b16 %v1224
      %v1381 = vunpack.c.l.b16 %v1225
      %v1382 = vunpack.c.h.b16 %v1225
      %v1383 = vunpack.c.l.b16 %v1226
      %v1384 = vunpack.c.h.b16 %v1226
      %v1385 = vunpack.c.l.b16 %v1227
      %v1386 = vunpack.c.h.b16 %v1227
      %v1387 = vunpack.c.l.b16 %v1228
      %v1388 = vunpack.c.h.b16 %v1228
      %v1389 = vunpack.c.l.b16 %v1229
      %v1390 = vunpack.c.h.b16 %v1229
      %v1391 = vunpack.c.l.b16 %v1230
      %v1392 = vunpack.c.h.b16 %v1230
      %v1393 = vunpack.c.l.b16 %v1231
      %v1394 = vunpack.c.h.b16 %v1231
      %v1395 = vunpack.c.l.b16 %v1232
      %v1396 = vunpack.c.h.b16 %v1232
      %v1397 = vunpack.c.l.b16 %v1233
      %v1398 = vunpack.c.h.b16 %v1233
      %v1399 = vunpack.c.l.b16 %v1234
      %v1400 = vunpack.c.h.b16 %v1234
      %v1401 = vunpack.c.l.b16 %v1235
      %v1402 = vunpack.c.h.b16 %v1235
      %v1403 = vunpack.c.l.b16 %v1236
      %v1404 = vunpack.c.h.b16 %v1236
      %v1405 = vunpack.c.l.b16 %v1237
      %v1406 = vunpack.c.h.b16 %v1237
      %v1407 = vunpack.c.l.b16 %v1238
      %v1408 = vunpack.c.h.b16 %v1238
      %v1409 = vunpack.c.l.b16 %v1239
      %v1410 = vunpack.c.h.b16 %v1239
      %v1411 = vunpack.c.l.b16 %v1240
      %v1412 = vunpack.c.h.b16 %v1240
      %v1413 = vunpack.c.l.b16 %v1241
      %v1414 = vunpack.c.h.b16 %v1241
      %v1415 = vunpack.c.l.b16 %v1242
      %v1416 = vunpack.c.h.b16 %v1242
      %v1417 = vunpack.c.l.b16 %v1243
      %v1418 = vunpack.c.h.b16 %v1243
      %v1419 = vunpack.c.l.b16 %v1244
      %v1420 = vunpack.c.h.b16 %v1244
      %v1421 = vunpack.c.l.b16 %v1245
      %v1422 = vunpack.c.h.b16 %v1245
      %v1423 = vunpack.c.l.b16 %v1246
      %v1424 = vunpack.c.h.b16 %v1246
      %v1425 = vunpack.c.l.b16 %v1247
      %v1426 = vunpack.c.h.b16 %v1247
      %v1427 = vunpack.c.l.b16 %v1248
      %v1428 = vunpack.c.h.b16 %v1248
      %v1429 = vunpack.c.l.b16 %v1249
      %v1430 = vunpack.c.h.b16 %v1249
      %v1431 = vunpack.c.l.b16 %v1250
      %v1432 = vunpack.c.h.b16 %v1250
      %v1433 = vunpack.c.l.b16 %v1251
      %v1434 = vunpack.c.h.b16 %v1251
      %v1435 = vunpack.c.l.b16 %v1252
      %v1436 = vunpack.c.h.b16 %v1252
      %v1437 = vunpack.c.l.b16 %v1253
      %v1438 = vunpack.c.h.b16 %v1253
      %v1439 = vunpack.c.l.b16 %v1254
      %v1440 = vunpack.c.h.b16 %v1254
      %v1441 = vunpack.c.l.b16 %v1255
      %v1442 = vunpack.c.h.b16 %v1255
      %v1443 = vunpack.c.l.b16 %v1256
      %v1444 = vunpack.c.h.b16 %v1256
      %v1445 = vunpack.c.l.b16 %v1257
      %v1446 = vunpack.c.h.b16 %v1257
      %v1447 = vunpack.c.l.b16 %v1258
      %v1448 = vunpack.c.h.b16 %v1258
      %v1449 = vunpack.c.l.b16 %v1259
      %v1450 = vunpack.c.h.b16 %v1259
      %v1451 = vunpack.c.l.b16 %v1260
      %v1452 = vunpack.c.h.b16 %v1260
      %v1453 = vunpack.c.l.b16 %v1261
      %v1454 = vunpack.c.h.b16 %v1261
      %v1455 = vunpack.c.l.b16 %v1262
      %v1456 = vunpack.c.h.b16 %v1262
      %v1457 = vunpack.c.l.b16 %v1263
      %v1458 = vunpack.c.h.b16 %v1263
      %v1459 = vunpack.c.l.b16 %v1264
      %v1460 = vunpack.c.h.b16 %v1264
      %v1461 = vunpack.c.l.b16 %v1265
      %v1462 = vunpack.c.h.b16 %v1265
      %v1463 = vunpack.c.l.b16 %v1266
      %v1464 = vunpack.c.h.b16 %v1266
      %v1465 = vunpack.c.l.b16 %v1267
      %v1466 = vunpack.c.h.b16 %v1267
      %v1467 = vunpack.c.l.b16 %v1268
      %v1468 = vunpack.c.h.b16 %v1268
      %v1469 = vunpack.c.l.b16 %v1269
      %v1470 = vunpack.c.h.b16 %v1269
      %v1471 = vunpack.c.l.b16 %v1270
      %v1472 = vunpack.c.h.b16 %v1270
      %v1473 = vunpack.c.l.b16 %v1271
      %v1474 = vunpack.c.h.b16 %v1271
      %v1475 = vunpack.c.l.b16 %v1272
      %v1476 = vunpack.c.h.b16 %v1272
      %v1477 = vunpack.c.l.b16 %v1273
      %v1478 = vunpack.c.h.b16 %v1273
      %v1479 = vunpack.c.l.b16 %v1274
      %v1480 = vunpack.c.h.b16 %v1274
      %v1481 = vunpack.c.l.b16 %v1275
      %v1482 = vunpack.c.h.b16 %v1275
      %v1483 = vunpack.c.l.b16 %v1276
      %v1484 = vunpack.c.h.b16 %v1276
      %v1485 = vunpack.c.l.b16 %v1277
      %v1486 = vunpack.c.h.b16 %v1277
      %v1487 = vunpack.c.l.b16 %v1278
      %v1488 = vunpack.c.h.b16 %v1278
      %v1489 = vunpack.c.l.b16 %v1279
      %v1490 = vunpack.c.h.b16 %v1279
      %v1491 = vunpack.c.l.b16 %v1280
      %v1492 = vunpack.c.h.b16 %v1280
      %v1493 = vunpack.c.l.b16 %v1281
      %v1494 = vunpack.c.h.b16 %v1281
      %v1495 = vunpack.c.l.b16 %v1282
      %v1496 = vunpack.c.h.b16 %v1282
      %v1497 = vpack.c.b16 %v1373, %v1369
      %v1498 = vpack.c.b16 %v1374, %v1370
      %v1499 = vpack.c.b16 %v1375, %v1371
      %v1500 = vpack.c.b16 %v1376, %v1372
      %v1501 = vpack.c.b16 %v1381, %v1377
      %v1502 = vpack.c.b16 %v1382, %v1378
      %v1503 = vpack.c.b16 %v1383, %v1379
      %v1504 = vpack.c.b16 %v1384, %v1380
      %v1505 = vpack.c.b16 %v1389, %v1385
      %v1506 = vpack.c.b16 %v1390, %v1386
      %v1507 = vpack.c.b16 %v1391, %v1387
      %v1508 = vpack.c.b16 %v1392, %v1388
      %v1509 = vpack.c.b16 %v1397, %v1393
      %v1510 = vpack.c.b16 %v1398, %v1394
      %v1511 = vpack.c.b16 %v1399, %v1395
      %v1512 = vpack.c.b16 %v1400, %v1396
      %v1513 = vpack.c.b16 %v1405, %v1401
      %v1514 = vpack.c.b16 %v1406, %v1402
      %v1515 = vpack.c.b16 %v1407, %v1403
      %v1516 = vpack.c.b16 %v1408, %v1404
      %v1517 = vpack.c.b16 %v1413, %v1409
      %v1518 = vpack.c.b16 %v1414, %v1410
      %v1519 = vpack.c.b16 %v1415, %v1411
      %v1520 = vpack.c.b16 %v1416, %v1412
      %v1521 = vpack.c.b16 %v1421, %v1417
      %v1522 = vpack.c.b16 %v1422, %v1418
      %v1523 = vpack.c.b16 %v1423, %v1419
      %v1524 = vpack.c.b16 %v1424, %v1420
      %v1525 = vpack.c.b16 %v1429, %v1425
      %v1526 = vpack.c.b16 %v1430, %v1426
      %v1527 = vpack.c.b16 %v1431, %v1427
      %v1528 = vpack.c.b16 %v1432, %v1428
      %v1529 = vpack.c.b16 %v1437, %v1433
      %v1530 = vpack.c.b16 %v1438, %v1434
      %v1531 = vpack.c.b16 %v1439, %v1435
      %v1532 = vpack.c.b16 %v1440, %v1436
      %v1533 = vpack.c.b16 %v1445, %v1441
      %v1534 = vpack.c.b16 %v1446, %v1442
      %v1535 = vpack.c.b16 %v1447, %v1443
      %v1536 = vpack.c.b16 %v1448, %v1444
      %v1537 = vpack.c.b16 %v1453, %v1449
      %v1538 = vpack.c.b16 %v1454, %v1450
      %v1539 = vpack.c.b16 %v1455, %v1451
      %v1540 = vpack.c.b16 %v1456, %v1452
      %v1541 = vpack.c.b16 %v1461, %v1457
      %v1542 = vpack.c.b16 %v1462, %v1458
      %v1543 = vpack.c.b16 %v1463, %v1459
      %v1544 = vpack.c.b16 %v1464, %v1460
      %v1545 = vpack.c.b16 %v1469, %v1465
      %v1546 = vpack.c.b16 %v1470, %v1466
      %v1547 = vpack.c.b16 %v1471, %v1467
      %v1548 = vpack.c.b16 %v1472, %v1468
      %v1549 = vpack.c.b16 %v1477, %v1473
      %v1550 = vpack.c.b16 %v1478, %v1474
      %v1551 = vpack.c.b16 %v1479, %v1475
      %v1552 = vpack.c.b16 %v1480, %v1476
      %v1553 = vpack.c.b16 %v1485, %v1481
      %v1554 = vpack.c.b16 %v1486, %v1482
      %v1555 = vpack.c.b16 %v1487, %v1483
      %v1556 = vpack.c.b16 %v1488, %v1484
      %v1557 = vpack.c.b16 %v1493, %v1489
      %v1558 = vpack.c.b16 %v1494, %v1490
      %v1559 = vpack.c.b16 %v1495, %v1491
      %v1560 = vpack.c.b16 %v1496, %v1492
      %1625 = vmatprep.subr.bf16.mxu0 %v1526
      %1626 = vmatpush1.bf16.msra.mxu0 %v1525
      %1627 = vmatprep.subr.bf16.mxu0 %v1522
      %1628 = vmatpush1.bf16.msra.mxu0 %v1521
      %1629 = vmatprep.subr.bf16.mxu0 %v1518
      %1630 = vmatpush1.bf16.msra.mxu0 %v1517
      %1631 = vmatprep.subr.bf16.mxu0 %v1514
      %1632 = vmatpush1.bf16.msra.mxu0 %v1513
      %1633 = vmatprep.subr.bf16.mxu0 %v1510
      %1634 = vmatpush1.bf16.msra.mxu0 %v1509
      %1635 = vmatprep.subr.bf16.mxu0 %v1506
      %1636 = vmatpush1.bf16.msra.mxu0 %v1505
      %1637 = vmatprep.subr.bf16.mxu0 %v1502
      %1638 = vmatpush1.bf16.msra.mxu0 %v1501
      %1639 = vmatprep.subr.bf16.mxu0 %v1498
      %1640 = vmatpush1.bf16.msra.mxu0 %v1497
      %1641 = vmatprep.subr.bf16.mxu0 %v1558
      %1642 = vmatpush2.bf16.msra.mxu0 %v1557
      %1643 = vmatprep.subr.bf16.mxu0 %v1554
      %1644 = vmatpush2.bf16.msra.mxu0 %v1553
      %1645 = vmatprep.subr.bf16.mxu0 %v1550
      %1646 = vmatpush2.bf16.msra.mxu0 %v1549
      %1647 = vmatprep.subr.bf16.mxu0 %v1546
      %1648 = vmatpush2.bf16.msra.mxu0 %v1545
      %1649 = vmatprep.subr.bf16.mxu0 %v1542
      %1650 = vmatpush2.bf16.msra.mxu0 %v1541
      %1651 = vmatprep.subr.bf16.mxu0 %v1538
      %1652 = vmatpush2.bf16.msra.mxu0 %v1537
      %1653 = vmatprep.subr.bf16.mxu0 %v1534
      %1654 = vmatpush2.bf16.msra.mxu0 %v1533
      %1655 = vmatprep.subr.bf16.mxu0 %v1530
      %1656 = vmatpush2.bf16.msra.mxu0 %v1529
      %1657 = vmatprep.mubr.bf16.mxu0 %v1218
      %1658 = vmatmul.mubr.bf16.gmra.mxu0 %v1217
      %v1659 = vpop.f32.mrf.mxu0
      %v1660 = vadd.f32 %v1288, %v1659
      %v1661 = vpop.f32.mrf.mxu0
      %v1662 = vadd.f32 %v1292, %v1661
      %v1663 = vpop.f32.mrf.mxu0
      %v1664 = vadd.f32 %v1288, %v1663
      %v1665 = vpop.f32.mrf.mxu0
      %v1666 = vadd.f32 %v1292, %v1665
      %1667 = vdwg.mxu0
      %1668 = vmatprep.subr.bf16.mxu0 %v1528
      %1669 = vmatpush1.bf16.msra.mxu0 %v1527
      %1670 = vmatprep.subr.bf16.mxu0 %v1524
      %1671 = vmatpush1.bf16.msra.mxu0 %v1523
      %1672 = vmatprep.subr.bf16.mxu0 %v1520
      %1673 = vmatpush1.bf16.msra.mxu0 %v1519
      %1674 = vmatprep.subr.bf16.mxu0 %v1516
      %1675 = vmatpush1.bf16.msra.mxu0 %v1515
      %1676 = vmatprep.subr.bf16.mxu0 %v1512
      %1677 = vmatpush1.bf16.msra.mxu0 %v1511
      %1678 = vmatprep.subr.bf16.mxu0 %v1508
      %1679 = vmatpush1.bf16.msra.mxu0 %v1507
      %1680 = vmatprep.subr.bf16.mxu0 %v1504
      %1681 = vmatpush1.bf16.msra.mxu0 %v1503
      %1682 = vmatprep.subr.bf16.mxu0 %v1500
      %1683 = vmatpush1.bf16.msra.mxu0 %v1499
      %1684 = vmatprep.subr.bf16.mxu0 %v1560
      %1685 = vmatpush2.bf16.msra.mxu0 %v1559
      %1686 = vmatprep.subr.bf16.mxu0 %v1556
      %1687 = vmatpush2.bf16.msra.mxu0 %v1555
      %1688 = vmatprep.subr.bf16.mxu0 %v1552
      %1689 = vmatpush2.bf16.msra.mxu0 %v1551
      %1690 = vmatprep.subr.bf16.mxu0 %v1548
      %1691 = vmatpush2.bf16.msra.mxu0 %v1547
      %1692 = vmatprep.subr.bf16.mxu0 %v1544
      %1693 = vmatpush2.bf16.msra.mxu0 %v1543
      %1694 = vmatprep.subr.bf16.mxu0 %v1540
      %1695 = vmatpush2.bf16.msra.mxu0 %v1539
      %1696 = vmatprep.subr.bf16.mxu0 %v1536
      %1697 = vmatpush2.bf16.msra.mxu0 %v1535
      %1698 = vmatprep.subr.bf16.mxu0 %v1532
      %1699 = vmatpush2.bf16.msra.mxu0 %v1531
      %1700 = vmatprep.mubr.bf16.mxu0 %v1218
      %1701 = vmatmul.mubr.bf16.gmra.mxu0 %v1217
      %v1702 = vpop.f32.mrf.mxu0
      %v1703 = vadd.f32 %v1296, %v1702
      %v1704 = vpop.f32.mrf.mxu0
      %v1705 = vadd.f32 %v1300, %v1704
      %v1706 = vpop.f32.mrf.mxu0
      %v1707 = vadd.f32 %v1296, %v1706
      %v1708 = vpop.f32.mrf.mxu0
      %v1709 = vadd.f32 %v1300, %v1708
      %1710 = vdwg.mxu0
      %v1711 = vld [vmem:[%s565] sm:$0xf]
      %v1712 = vld [vmem:[%s565 + $0x4] sm:$0xf]
      %v1713 = vld [vmem:[%s12] sm:$0xff]
      %v1714 = vld [vmem:[%s12 + $0x8] sm:$0xff]
      %v1715 = vld [vmem:[%s12 + $0x10] sm:$0xff]
      %v1716 = vld [vmem:[%s12 + $0x18] sm:$0xff]
      %v1717 = vld [vmem:[%s12 + $0x20] sm:$0xff]
      %v1718 = vld [vmem:[%s12 + $0x28] sm:$0xff]
      %v1719 = vld [vmem:[%s12 + $0x30] sm:$0xff]
      %v1720 = vld [vmem:[%s12 + $0x38] sm:$0xff]
      %v1721 = vld [vmem:[%s12 + $0x40] sm:$0xff]
      %v1722 = vld [vmem:[%s12 + $0x48] sm:$0xff]
      %v1723 = vld [vmem:[%s12 + $0x50] sm:$0xff]
      %v1724 = vld [vmem:[%s12 + $0x58] sm:$0xff]
      %v1725 = vld [vmem:[%s12 + $0x60] sm:$0xff]
      %v1726 = vld [vmem:[%s12 + $0x68] sm:$0xff]
      %v1727 = vld [vmem:[%s12 + $0x70] sm:$0xff]
      %v1728 = vld [vmem:[%s12 + $0x78] sm:$0xff]
      %v1729 = vld [vmem:[%s12 + $0x80] sm:$0xff]
      %v1730 = vld [vmem:[%s12 + $0x88] sm:$0xff]
      %v1731 = vld [vmem:[%s12 + $0x90] sm:$0xff]
      %v1732 = vld [vmem:[%s12 + $0x98] sm:$0xff]
      %v1733 = vld [vmem:[%s12 + $0xa0] sm:$0xff]
      %v1734 = vld [vmem:[%s12 + $0xa8] sm:$0xff]
      %v1735 = vld [vmem:[%s12 + $0xb0] sm:$0xff]
      %v1736 = vld [vmem:[%s12 + $0xb8] sm:$0xff]
      %v1739 = vunpack.c.l.b16 %v1711
      %v1740 = vunpack.c.l.b16 %v1712
      %v1741 = vpack.c.b16 %v1740, %v1739
      %v1766 = vunpack.c.l.b16 %v1713
      %v1767 = vunpack.c.h.b16 %v1713
      %v1768 = vunpack.c.l.b16 %v1714
      %v1769 = vunpack.c.h.b16 %v1714
      %v1770 = vunpack.c.l.b16 %v1715
      %v1771 = vunpack.c.h.b16 %v1715
      %v1772 = vunpack.c.l.b16 %v1716
      %v1773 = vunpack.c.h.b16 %v1716
      %v1774 = vunpack.c.l.b16 %v1717
      %v1775 = vunpack.c.h.b16 %v1717
      %v1776 = vunpack.c.l.b16 %v1718
      %v1777 = vunpack.c.h.b16 %v1718
      %v1778 = vunpack.c.l.b16 %v1719
      %v1779 = vunpack.c.h.b16 %v1719
      %v1780 = vunpack.c.l.b16 %v1720
      %v1781 = vunpack.c.h.b16 %v1720
      %v1782 = vunpack.c.l.b16 %v1721
      %v1783 = vunpack.c.h.b16 %v1721
      %v1784 = vunpack.c.l.b16 %v1722
      %v1785 = vunpack.c.h.b16 %v1722
      %v1786 = vunpack.c.l.b16 %v1723
      %v1787 = vunpack.c.h.b16 %v1723
      %v1788 = vunpack.c.l.b16 %v1724
      %v1789 = vunpack.c.h.b16 %v1724
      %v1790 = vunpack.c.l.b16 %v1725
      %v1791 = vunpack.c.h.b16 %v1725
      %v1792 = vunpack.c.l.b16 %v1726
      %v1793 = vunpack.c.h.b16 %v1726
      %v1794 = vunpack.c.l.b16 %v1727
      %v1795 = vunpack.c.h.b16 %v1727
      %v1796 = vunpack.c.l.b16 %v1728
      %v1797 = vunpack.c.h.b16 %v1728
      %v1798 = vunpack.c.l.b16 %v1729
      %v1799 = vunpack.c.h.b16 %v1729
      %v1800 = vunpack.c.l.b16 %v1730
      %v1801 = vunpack.c.h.b16 %v1730
      %v1802 = vunpack.c.l.b16 %v1731
      %v1803 = vunpack.c.h.b16 %v1731
      %v1804 = vunpack.c.l.b16 %v1732
      %v1805 = vunpack.c.h.b16 %v1732
      %v1806 = vunpack.c.l.b16 %v1733
      %v1807 = vunpack.c.h.b16 %v1733
      %v1808 = vunpack.c.l.b16 %v1734
      %v1809 = vunpack.c.h.b16 %v1734
      %v1810 = vunpack.c.l.b16 %v1735
      %v1811 = vunpack.c.h.b16 %v1735
      %v1812 = vunpack.c.l.b16 %v1736
      %v1813 = vunpack.c.h.b16 %v1736
      %v1814 = vpack.c.b16 %v1770, %v1766
      %v1815 = vpack.c.b16 %v1771, %v1767
      %v1816 = vpack.c.b16 %v1772, %v1768
      %v1817 = vpack.c.b16 %v1773, %v1769
      %v1818 = vpack.c.b16 %v1778, %v1774
      %v1819 = vpack.c.b16 %v1779, %v1775
      %v1820 = vpack.c.b16 %v1780, %v1776
      %v1821 = vpack.c.b16 %v1781, %v1777
      %v1822 = vpack.c.b16 %v1786, %v1782
      %v1823 = vpack.c.b16 %v1787, %v1783
      %v1824 = vpack.c.b16 %v1788, %v1784
      %v1825 = vpack.c.b16 %v1789, %v1785
      %v1826 = vpack.c.b16 %v1794, %v1790
      %v1827 = vpack.c.b16 %v1795, %v1791
      %v1828 = vpack.c.b16 %v1796, %v1792
      %v1829 = vpack.c.b16 %v1797, %v1793
      %v1830 = vpack.c.b16 %v1802, %v1798
      %v1831 = vpack.c.b16 %v1803, %v1799
      %v1832 = vpack.c.b16 %v1804, %v1800
      %v1833 = vpack.c.b16 %v1805, %v1801
      %v1834 = vpack.c.b16 %v1810, %v1806
      %v1835 = vpack.c.b16 %v1811, %v1807
      %v1836 = vpack.c.b16 %v1812, %v1808
      %v1837 = vpack.c.b16 %v1813, %v1809
      %vm1862 = vcmask 785408
      %v1864 = vsel %vm1862, %v1741, 0
      %1866 = vmatprep.subr.bf16.mxu0 0
      %1867 = vmatpush1.bf16.msra.mxu0 0
      %1868 = vmatprep.subr.bf16.mxu0 0
      %1869 = vmatpush1.bf16.msra.mxu0 0
      %1870 = vmatprep.subr.bf16.mxu0 %v1835
      %1871 = vmatpush1.bf16.msra.mxu0 %v1834
      %1872 = vmatprep.subr.bf16.mxu0 %v1831
      %1873 = vmatpush1.bf16.msra.mxu0 %v1830
      %1874 = vmatprep.subr.bf16.mxu0 %v1827
      %1875 = vmatpush1.bf16.msra.mxu0 %v1826
      %1876 = vmatprep.subr.bf16.mxu0 %v1823
      %1877 = vmatpush1.bf16.msra.mxu0 %v1822
      %1878 = vmatprep.subr.bf16.mxu0 %v1819
      %1879 = vmatpush1.bf16.msra.mxu0 %v1818
      %1880 = vmatprep.subr.bf16.mxu0 %v1815
      %1881 = vmatpush1.bf16.msra.mxu0 %v1814
      %1882 = vmatprep.subr.bf16.mxu0 0
      %1883 = vmatpush2.bf16.msra.mxu0 0
      %1884 = vmatprep.subr.bf16.mxu0 0
      %1885 = vmatpush2.bf16.msra.mxu0 0
      %1886 = vmatprep.subr.bf16.mxu0 0
      %1887 = vmatpush2.bf16.msra.mxu0 0
      %1888 = vmatprep.subr.bf16.mxu0 0
      %1889 = vmatpush2.bf16.msra.mxu0 0
      %1890 = vmatprep.subr.bf16.mxu0 0
      %1891 = vmatpush2.bf16.msra.mxu0 0
      %1892 = vmatprep.subr.bf16.mxu0 0
      %1893 = vmatpush2.bf16.msra.mxu0 0
      %1894 = vmatprep.subr.bf16.mxu0 0
      %1895 = vmatpush2.bf16.msra.mxu0 0
      %1896 = vmatprep.subr.bf16.mxu0 0
      %1897 = vmatpush2.bf16.msra.mxu0 0
      %1898 = vmatprep.mubr.bf16.mxu0 0
      %1899 = vmatmul.mubr.bf16.gmra.mxu0 %v1864
      %v1900 = vpop.f32.mrf.mxu0
      %v1901 = vadd.f32 0.0, %v1900
      %v1902 = vpop.f32.mrf.mxu0
      %v1903 = vadd.f32 0.0, %v1902
      %v1904 = vpop.f32.mrf.mxu0
      %v1905 = vadd.f32 0.0, %v1904
      %v1906 = vpop.f32.mrf.mxu0
      %v1907 = vadd.f32 0.0, %v1906
      %1908 = vdwg.mxu0
      %1909 = vmatprep.subr.bf16.mxu0 0
      %1910 = vmatpush1.bf16.msra.mxu0 0
      %1911 = vmatprep.subr.bf16.mxu0 0
      %1912 = vmatpush1.bf16.msra.mxu0 0
      %1913 = vmatprep.subr.bf16.mxu0 %v1837
      %1914 = vmatpush1.bf16.msra.mxu0 %v1836
      %1915 = vmatprep.subr.bf16.mxu0 %v1833
      %1916 = vmatpush1.bf16.msra.mxu0 %v1832
      %1917 = vmatprep.subr.bf16.mxu0 %v1829
      %1918 = vmatpush1.bf16.msra.mxu0 %v1828
      %1919 = vmatprep.subr.bf16.mxu0 %v1825
      %1920 = vmatpush1.bf16.msra.mxu0 %v1824
      %1921 = vmatprep.subr.bf16.mxu0 %v1821
      %1922 = vmatpush1.bf16.msra.mxu0 %v1820
      %1923 = vmatprep.subr.bf16.mxu0 %v1817
      %1924 = vmatpush1.bf16.msra.mxu0 %v1816
      %1925 = vmatprep.subr.bf16.mxu0 0
      %1926 = vmatpush2.bf16.msra.mxu0 0
      %1927 = vmatprep.subr.bf16.mxu0 0
      %1928 = vmatpush2.bf16.msra.mxu0 0
      %1929 = vmatprep.subr.bf16.mxu0 0
      %1930 = vmatpush2.bf16.msra.mxu0 0
      %1931 = vmatprep.subr.bf16.mxu0 0
      %1932 = vmatpush2.bf16.msra.mxu0 0
      %1933 = vmatprep.subr.bf16.mxu0 0
      %1934 = vmatpush2.bf16.msra.mxu0 0
      %1935 = vmatprep.subr.bf16.mxu0 0
      %1936 = vmatpush2.bf16.msra.mxu0 0
      %1937 = vmatprep.subr.bf16.mxu0 0
      %1938 = vmatpush2.bf16.msra.mxu0 0
      %1939 = vmatprep.subr.bf16.mxu0 0
      %1940 = vmatpush2.bf16.msra.mxu0 0
      %1941 = vmatprep.mubr.bf16.mxu0 0
      %1942 = vmatmul.mubr.bf16.gmra.mxu0 %v1864
      %v1943 = vpop.f32.mrf.mxu0
      %v1944 = vadd.f32 0.0, %v1943
      %v1945 = vpop.f32.mrf.mxu0
      %v1946 = vadd.f32 0.0, %v1945
      %v1947 = vpop.f32.mrf.mxu0
      %v1948 = vadd.f32 0.0, %v1947
      %v1949 = vpop.f32.mrf.mxu0
      %v1950 = vadd.f32 0.0, %v1949
      %1951 = vdwg.mxu0
      %v1952 = vpack.c.bf16 %v1905, %v1901
      %v1953 = vpack.c.bf16 %v1907, %v1903
      %v1954 = vpack.c.bf16 %v1948, %v1944
      %v1955 = vpack.c.bf16 %v1950, %v1946
      %v1956 = vld [vmem:[%s588] sm:$0xf]
      %v1957 = vld [vmem:[%s588 + $0x4] sm:$0xf]
      %v1960 = vunpack.c.l.b16 %v1956
      %v1961 = vunpack.c.l.b16 %v1957
      %v1962 = vpack.c.b16 %v1961, %v1960
      %v1964 = vsel %vm901, %v1962, 0
      %1966 = vmatprep.subr.bf16.mxu0 0
      %1967 = vmatpush1.bf16.msra.mxu0 0
      %1968 = vmatprep.subr.bf16.mxu0 0
      %1969 = vmatpush1.bf16.msra.mxu0 0
      %1970 = vmatprep.subr.bf16.mxu0 0
      %1971 = vmatpush1.bf16.msra.mxu0 0
      %1972 = vmatprep.subr.bf16.mxu0 0
      %1973 = vmatpush1.bf16.msra.mxu0 0
      %1974 = vmatprep.subr.bf16.mxu0 0
      %1975 = vmatpush1.bf16.msra.mxu0 0
      %1976 = vmatprep.subr.bf16.mxu0 0
      %1977 = vmatpush1.bf16.msra.mxu0 0
      %1978 = vmatprep.subr.bf16.mxu0 0
      %1979 = vmatpush1.bf16.msra.mxu0 0
      %1980 = vmatprep.subr.bf16.mxu0 %v1953
      %1981 = vmatpush1.bf16.msra.mxu0 %v1952
      %1982 = vmatprep.subr.bf16.mxu0 0
      %1983 = vmatpush2.bf16.msra.mxu0 0
      %1984 = vmatprep.subr.bf16.mxu0 0
      %1985 = vmatpush2.bf16.msra.mxu0 0
      %1986 = vmatprep.subr.bf16.mxu0 0
      %1987 = vmatpush2.bf16.msra.mxu0 0
      %1988 = vmatprep.subr.bf16.mxu0 0
      %1989 = vmatpush2.bf16.msra.mxu0 0
      %1990 = vmatprep.subr.bf16.mxu0 0
      %1991 = vmatpush2.bf16.msra.mxu0 0
      %1992 = vmatprep.subr.bf16.mxu0 0
      %1993 = vmatpush2.bf16.msra.mxu0 0
      %1994 = vmatprep.subr.bf16.mxu0 0
      %1995 = vmatpush2.bf16.msra.mxu0 0
      %1996 = vmatprep.subr.bf16.mxu0 0
      %1997 = vmatpush2.bf16.msra.mxu0 0
      %1998 = vmatprep.mubr.bf16.mxu0 0
      %1999 = vmatmul.mubr.bf16.gmra.mxu0 %v1964
      %v2000 = vpop.f32.mrf.mxu0
      %v2001 = vadd.f32 0.0, %v2000
      %v2002 = vpop.f32.mrf.mxu0
      %v2003 = vadd.f32 0.0, %v2002
      %v2004 = vpop.f32.mrf.mxu0
      %v2005 = vadd.f32 0.0, %v2004
      %v2006 = vpop.f32.mrf.mxu0
      %v2007 = vadd.f32 0.0, %v2006
      %2008 = vdwg.mxu0
      %2009 = vmatprep.subr.bf16.mxu0 0
      %2010 = vmatpush1.bf16.msra.mxu0 0
      %2011 = vmatprep.subr.bf16.mxu0 0
      %2012 = vmatpush1.bf16.msra.mxu0 0
      %2013 = vmatprep.subr.bf16.mxu0 0
      %2014 = vmatpush1.bf16.msra.mxu0 0
      %2015 = vmatprep.subr.bf16.mxu0 0
      %2016 = vmatpush1.bf16.msra.mxu0 0
      %2017 = vmatprep.subr.bf16.mxu0 0
      %2018 = vmatpush1.bf16.msra.mxu0 0
      %2019 = vmatprep.subr.bf16.mxu0 0
      %2020 = vmatpush1.bf16.msra.mxu0 0
      %2021 = vmatprep.subr.bf16.mxu0 0
      %2022 = vmatpush1.bf16.msra.mxu0 0
      %2023 = vmatprep.subr.bf16.mxu0 %v1955
      %2024 = vmatpush1.bf16.msra.mxu0 %v1954
      %2025 = vmatprep.subr.bf16.mxu0 0
      %2026 = vmatpush2.bf16.msra.mxu0 0
      %2027 = vmatprep.subr.bf16.mxu0 0
      %2028 = vmatpush2.bf16.msra.mxu0 0
      %2029 = vmatprep.subr.bf16.mxu0 0
      %2030 = vmatpush2.bf16.msra.mxu0 0
      %2031 = vmatprep.subr.bf16.mxu0 0
      %2032 = vmatpush2.bf16.msra.mxu0 0
      %2033 = vmatprep.subr.bf16.mxu0 0
      %2034 = vmatpush2.bf16.msra.mxu0 0
      %2035 = vmatprep.subr.bf16.mxu0 0
      %2036 = vmatpush2.bf16.msra.mxu0 0
      %2037 = vmatprep.subr.bf16.mxu0 0
      %2038 = vmatpush2.bf16.msra.mxu0 0
      %2039 = vmatprep.subr.bf16.mxu0 0
      %2040 = vmatpush2.bf16.msra.mxu0 0
      %2041 = vmatprep.mubr.bf16.mxu0 0
      %2042 = vmatmul.mubr.bf16.gmra.mxu0 %v1964
      %v2043 = vpop.f32.mrf.mxu0
      %v2044 = vadd.f32 0.0, %v2043
      %v2045 = vpop.f32.mrf.mxu0
      %v2046 = vadd.f32 0.0, %v2045
      %v2047 = vpop.f32.mrf.mxu0
      %v2048 = vadd.f32 0.0, %v2047
      %v2049 = vpop.f32.mrf.mxu0
      %v2050 = vadd.f32 0.0, %v2049
      %2051 = vdwg.mxu0
      %v2052 = vadd.f32 %v1660, %v2001
      %v2053 = vadd.f32 %v1662, %v2003
      %v2054 = vadd.f32 %v1703, %v2044
      %v2055 = vadd.f32 %v1705, %v2046
      %v2056 = vadd.f32 %v1664, %v2005
      %v2057 = vadd.f32 %v1666, %v2007
      %v2058 = vadd.f32 %v1707, %v2048
      %v2059 = vadd.f32 %v1709, %v2050
      %v2060 = vld [vmem:[%s13] sm:$0xf]
      %v2062 = vlaneseq
      %v2063 = vshrl.u32 %v2062, 7
      %v2064 = vsub.s32 0, %v2063
      %v2065 = vrot.slane %v2060, %v2064
      %v2066 = vlaneseq
      %v2067 = vshrl.u32 %v2066, 7
      %v2068 = vsub.s32 1, %v2067
      %v2069 = vrot.slane %v2060, %v2068
      %v2070 = vlaneseq
      %v2071 = vshrl.u32 %v2070, 7
      %v2072 = vsub.s32 2, %v2071
      %v2073 = vrot.slane %v2060, %v2072
      %v2074 = vlaneseq
      %v2075 = vshrl.u32 %v2074, 7
      %v2076 = vsub.s32 3, %v2075
      %v2077 = vrot.slane %v2060, %v2076
      %v2082 = vadd.f32 %v2052, %v2065
      %v2083 = vadd.f32 %v2053, %v2069
      %v2084 = vadd.f32 %v2054, %v2073
      %v2085 = vadd.f32 %v2055, %v2077
      %v2086 = vadd.f32 %v2056, %v2065
      %v2087 = vadd.f32 %v2057, %v2069
      %v2088 = vadd.f32 %v2058, %v2073
      %v2089 = vadd.f32 %v2059, %v2077
      %v2090 = vmax.f32 %v2082, 0.0
      %v2091 = vmax.f32 %v2083, 0.0
      %v2092 = vmax.f32 %v2084, 0.0
      %v2093 = vmax.f32 %v2085, 0.0
      %v2094 = vmax.f32 %v2086, 0.0
      %v2095 = vmax.f32 %v2087, 0.0
      %v2096 = vmax.f32 %v2088, 0.0
      %v2097 = vmax.f32 %v2089, 0.0
      %2098 = vst [vmem:[%s599] sm:$0xff] %v2090
      %2099 = vst [vmem:[%s599 + $0x8] sm:$0xff] %v2091
      %2100 = vst [vmem:[%s599 + $0x10] sm:$0xff] %v2092
      %2101 = vst [vmem:[%s599 + $0x18] sm:$0xff] %v2093
      %2102 = vst [vmem:[%s599 + $0x20] sm:$0xff] %v2094
      %2103 = vst [vmem:[%s599 + $0x28] sm:$0xff] %v2095
      %2104 = vst [vmem:[%s599 + $0x30] sm:$0xff] %v2096
      %2105 = vst [vmem:[%s599 + $0x38] sm:$0xff] %v2097
      %s2106 = smul.u32 2, %s30
      %p2107 = scmp.lt.s32.totalorder %s29, 1
      %s2108 = scalar_select %p2107, %s29, 1
      %p2109 = scmp.lt.s32.totalorder %s2106, 3
      %s2110 = scalar_select %p2109, %s2106, 3
      %s2111 = smul.addr %s2110, 4
      %s2112 = smul.addr %s2108, 16
      %s2113 = sadd.s32 %s2111, %s2112
      %s2114 = smul.addr %s2113, 8
      %s2115 = scalar_lea.vmem %s14, %s2114
      // Predicated region
      $region77: #{decoder_block_forward.1} parent=75 // pred_check
        %p2116 = pneg %p381
      $region78: #{decoder_block_forward.1} parent=75 // pred_check_branch
        %2118 = sbr.rel (%p2116) target = $region80
      $region79: #{decoder_block_forward.1} parent=75 // pred_region
        %s2119 = smul.u32 2, %s30
      $region80: #{decoder_block_forward.1} parent=75 // pred_fallthru
        _
    $region76: #{decoder_block_forward.1} parent=5 // pred_fallthru
      _
    %p2120 = scmp.le.s32.totalorder 2, %s20
    // Predicated region
    $region81: #{decoder_block_forward.1} parent=5 // pred_check
      %p2121 = pneg %p2120
    $region82: #{decoder_block_forward.1} parent=5 // pred_check_branch
      %2123 = sbr.rel (%p2121) target = $region84
    $region83: #{decoder_block_forward.1} parent=5 // pred_region
      %s2124 = ssub.s32 %s20, 2
      // Predicated region
      $region85: #{decoder_block_forward.1} parent=83 // pred_check
        %p2125 = pneg %p387
      $region86: #{decoder_block_forward.1} parent=83 // pred_check_branch
        %2127 = sbr.rel (%p2125) target = $region88
      $region87: #{decoder_block_forward.1} parent=83 // pred_region
        %s2128 = smul.u32 2, %s32
        %p2129 = scmp.lt.s32.totalorder %s31, 1
        %s2130 = scalar_select %p2129, %s31, 1
        %p2131 = scmp.lt.s32.totalorder %s2128, 3
        %s2132 = scalar_select %p2131, %s2128, 3
        %s2133 = smul.addr %s2132, 4
        %s2134 = smul.addr %s2130, 16
        %s2135 = sadd.s32 %s2133, %s2134
        %s2136 = smul.addr %s2135, 8
        %s2137 = scalar_lea.vmem %s14, %s2136
      $region88: #{decoder_block_forward.1} parent=83 // pred_fallthru
        _
    $region84: #{decoder_block_forward.1} parent=5 // pred_fallthru
      _
  $region6: #{decoder_block_forward.1} parent=0 // loop_footer
    %s24 = sadd.s32 1, %s20
  $region7: #{decoder_block_forward.1} parent=0 // loop_footer_branch
    %19 = sbr.rel target = $region3
  $region8: #{decoder_block_forward.1} parent=0 // loop_exit
    _

</llo_original>
